<compile_context>
chip_gen: v7x
topology: tpu7x:2x2x1
jax: 0.10.0
libtpu: 0.0.40
codegen_flags: <defaults>
</compile_context>

<pallas_src>
import numpy as np
import jax
import jax.numpy as jnp
from jax.experimental import pallas as pl
from jax.experimental.pallas import tpu as pltpu

LEAKY_SLOPE = 0.2
BN_EPS = 1e-5


# ----------------------------------------------------------------------------
# Kernel
# ----------------------------------------------------------------------------
def _make_kernel(n_layers, batch, lengths, channels):
    """Kernel for a fixed layer stack (statically unrolled).

    lengths:  [L0, L1, ..., Ln]   per-layer input lengths (Ln = final length)
    channels: [2, C0, C1, ...]    per-layer input channels
    """
    n_in = 1 + 5 * n_layers + 3     # x0 + per-layer(w, gamma, beta, m0, m3) + fc(3)

    def kernel(*refs):
        in_refs = refs[:n_in]
        out_ref = refs[n_in]
        pad_refs = refs[n_in + 1:]

        # Current activation: rows = (batch, position), cols = channels.
        h = in_refs[0][...]                     # (B*L0, 2) f32
        pos = 1
        for l in range(n_layers):
            w_ref = in_refs[pos]                # (4, Cin, Cout) bf16 conv taps
            g_ref = in_refs[pos + 1]            # (1, Cout) BN gamma
            be_ref = in_refs[pos + 2]           # (1, Cout) BN beta
            m0_ref = in_refs[pos + 3]           # (B*Lout, 1) mask for tap k=0
            m3_ref = in_refs[pos + 4]           # (B*Lout, 1) mask for tap k=3
            pos += 5
            pad = pad_refs[l]

            l_in = lengths[l]
            l_out = l_in // 2
            c_in = channels[l]
            c_out = channels[l + 1]
            rows_in = batch * l_in
            rows_out = batch * l_out

            # Stage the activation into a zero-padded VMEM scratch:
            # rows 1..B*Lin hold the data, row 0 / row B*Lin+1 are zero pads.
            pad[pl.ds(0, 1), :] = jnp.zeros((1, c_in), jnp.float32)
            pad[pl.ds(rows_in + 1, 1), :] = jnp.zeros((1, c_in), jnp.float32)
            pad[pl.ds(1, rows_in), :] = h

            # Conv1d(kernel=4, stride=2, padding=1) as 4 tap matmuls over
            # stride-2 slices of the padded activation.  out[b,t] uses input
            # positions 2t+k-1, which is exactly pad row  b*Lin + 2t + k.
            acc = None
            for k in range(4):
                xk = pad[pl.ds(k, rows_out, 2), :]        # (B*Lout, Cin) f32
                if k == 0:
                    xk = xk * m0_ref[...]   # zero left-pad / cross-batch rows
                elif k == 3:
                    xk = xk * m3_ref[...]   # zero right-pad / cross-batch rows
                part = jnp.dot(xk.astype(jnp.bfloat16), w_ref[k],
                               preferred_element_type=jnp.float32)
                acc = part if acc is None else acc + part
            # NOTE: conv bias intentionally omitted -- it is cancelled exactly
            # by the training-mode BatchNorm mean subtraction below.

            # BatchNorm1d, training-mode batch statistics (per channel over
            # (batch, length) == per column over all rows).  Two-pass variance
            # for numerical safety; affine folded into a single FMA.
            inv_n = 1.0 / float(rows_out)
            mu = jnp.sum(acc, axis=0, keepdims=True) * inv_n        # (1, Cout)
            d = acc - mu
            var = jnp.sum(d * d, axis=0, keepdims=True) * inv_n     # biased
            scale = g_ref[...] * jax.lax.rsqrt(var + BN_EPS)
            h = d * scale + be_ref[...]
            # LeakyReLU(0.2)
            h = jnp.maximum(h, LEAKY_SLOPE * h)

        # Final Linear(D_last -> 1) + Sigmoid:
        #   elementwise multiply by the (pos, channel)-ordered fc weight,
        #   per-sample sum via one tiny pooling matmul + lane reduce,
        #   output written as a lane-dense (B, 128) slab (column 0 is valid).
        wfc_ref = in_refs[pos]                  # (B*Llast, Clast)
        pool_ref = in_refs[pos + 1]             # (B, B*Llast)
        bfc_ref = in_refs[pos + 2]              # (1, 1)
        t = h * wfc_ref[...]
        part = jnp.dot(pool_ref[...], t, preferred_element_type=jnp.float32)
        logit = jnp.sum(part, axis=1, keepdims=True) + bfc_ref[...]   # (B, 1)
        prob = 1.0 / (1.0 + jnp.exp(-logit))
        out_ref[...] = jnp.broadcast_to(prob, out_ref.shape)

    return kernel


def _full_spec(shape):
    nd = len(shape)
    return pl.BlockSpec(tuple(shape), lambda i, _nd=nd: (0,) * _nd)


# ----------------------------------------------------------------------------
# Parameter construction (deterministic, in-script)
# ----------------------------------------------------------------------------
def build_discriminator(key, discriminator_layer_size, input_length, class_num):
    n_layers = len(discriminator_layer_size)
    assert input_length % (2 ** n_layers) == 0, \
        "input_length must be divisible by 2**n_layers (k=4, s=2, p=1 convs)"

    keys = jax.random.split(key, 1 + 4 * n_layers + 2)
    ki = 0
    emb = jax.random.normal(keys[ki], (class_num, input_length), jnp.float32); ki += 1

    raw_convs, w_taps, gamma_rows, beta_rows = [], [], [], []
    in_ch, cur_len = 2, input_length
    for out_ch in discriminator_layer_size:
        w = 0.2 * jax.random.normal(keys[ki], (out_ch, in_ch, 4), jnp.float32); ki += 1
        b = 0.1 * jax.random.normal(keys[ki], (out_ch,), jnp.float32); ki += 1
        gamma = 1.0 + 0.1 * jax.random.normal(keys[ki], (out_ch,), jnp.float32); ki += 1
        beta = 0.1 * jax.random.normal(keys[ki], (out_ch,), jnp.float32); ki += 1
        raw_convs.append((w, b, gamma, beta))
        # Tap weights (4, Cin, Cout), bf16 for the MXU: tap[k, ci, co] = w[co, ci, k]
        w_taps.append(jnp.transpose(w, (2, 1, 0)).astype(jnp.bfloat16))
        gamma_rows.append(gamma[None, :])
        beta_rows.append(beta[None, :])
        in_ch, cur_len = out_ch, cur_len // 2

    wfc = 0.1 * jax.random.normal(keys[ki], (in_ch * cur_len, 1), jnp.float32); ki += 1
    bfc = 0.1 * jax.random.normal(keys[ki], (1, 1), jnp.float32); ki += 1

    return dict(emb=emb, raw_convs=raw_convs, w_taps=w_taps,
                gamma_row=gamma_rows, beta_row=beta_rows, wfc=wfc, bfc=bfc,
                layer_sizes=list(discriminator_layer_size),
                n_layers=n_layers, input_length=input_length, class_num=class_num)


# ----------------------------------------------------------------------------
# Forward (Pallas) and pure-JAX reference
# ----------------------------------------------------------------------------
def discriminator_forward(params, x, labels):
    B, L = x.shape
    assert L == params["input_length"]
    n_layers = params["n_layers"]
    lengths = [L // (2 ** l) for l in range(n_layers + 1)]
    channels = [2] + params["layer_sizes"]
    l_last, c_last = lengths[-1], channels[-1]

    # Embedding lookup hoisted out of the kernel (plain XLA gather).
    lab = jnp.take(params["emb"], labels, axis=0)              # (B, L)
    x0 = jnp.stack([x, lab], axis=-1).reshape(B * L, 2)        # rows=(b,pos), cols=[x,label]

    # fc weight re-laid out to the kernel's (pos, channel) flatten order,
    # tiled per batch row, plus a (B, B*Llast) pooling matrix.
    wfc_lc = params["wfc"].reshape(c_last, l_last).T           # (Llast, Clast)
    wfc_big = jnp.tile(wfc_lc, (B, 1))                         # (B*Llast, Clast)
    pool = jnp.asarray(np.kron(np.eye(B, dtype=np.float32),
                               np.ones((1, l_last), np.float32)))

    operands = [x0]
    for l in range(n_layers):
        l_out = lengths[l + 1]
        m0 = np.ones((B * l_out, 1), np.float32); m0[0::l_out] = 0.0
        m3 = np.ones((B * l_out, 1), np.float32); m3[l_out - 1::l_out] = 0.0
        operands += [params["w_taps"][l], params["gamma_row"][l],
                     params["beta_row"][l], jnp.asarray(m0), jnp.asarray(m3)]
    operands += [wfc_big, pool, params["bfc"]]

    kernel = _make_kernel(n_layers, B, lengths, channels)
    out = pl.pallas_call(
        kernel,
        out_shape=jax.ShapeDtypeStruct((B, 128), jnp.float32),
        grid=(1,),
        in_specs=[_full_spec(op.shape) for op in operands],
        out_specs=_full_spec((B, 128)),
        scratch_shapes=[pltpu.VMEM((B * lengths[l] + 2, channels[l]), jnp.float32)
                        for l in range(n_layers)],
        compiler_params=pltpu.CompilerParams(
            dimension_semantics=("arbitrary",)),
    )(*operands)
    return out[:, 0]     # column 0 of the lane-dense slab; matches torch's .squeeze()


def reference_forward(params, x, labels):
    """Pure-JAX reference mirroring the PyTorch module (training-mode BN, f32)."""
    lab = params["emb"][labels]                         # (B, L)
    h = jnp.stack([x, lab], axis=1)                     # (B, 2, L)
    for (w, b, g, be) in params["raw_convs"]:
        l_in = h.shape[2]
        l_out = l_in // 2
        hp = jnp.pad(h, ((0, 0), (0, 0), (1, 1)))
        cols = [jnp.einsum("bck,ock->bo", hp[:, :, 2 * t:2 * t + 4], w,
                           precision="highest") for t in range(l_out)]
        h = jnp.stack(cols, axis=-1) + b[None, :, None]
        mean = jnp.mean(h, axis=(0, 2), keepdims=True)
        var = jnp.mean((h - mean) ** 2, axis=(0, 2), keepdims=True)
        h = (h - mean) / jnp.sqrt(var + BN_EPS) * g[None, :, None] + be[None, :, None]
        h = jnp.where(h > 0, h, LEAKY_SLOPE * h)
    flat = h.reshape(h.shape[0], -1)
    out = jnp.dot(flat, params["wfc"], precision="highest") + params["bfc"]
    return jax.nn.sigmoid(out).squeeze()


# ----------------------------------------------------------------------------
if __name__ == "__main__":
    discriminator_layer_size = [8, 16]
    input_length = 32
    class_num = 4
    batch = 8

    root = jax.random.PRNGKey(0)
    k_params, k_x, k_lab = jax.random.split(root, 3)

    params = build_discriminator(k_params, discriminator_layer_size,
                                 input_length, class_num)

    x = jax.random.normal(k_x, (batch, input_length), jnp.float32)
    labels = jax.random.randint(k_lab, (batch,), 0, class_num, jnp.int32)

    out = jax.block_until_ready(discriminator_forward(params, x, labels))
    ref = jax.block_until_ready(reference_forward(params, x, labels))

    # Kernel uses bf16 MXU inputs (f32 accumulation); reference is pure f32.
    np.testing.assert_allclose(np.asarray(out), np.asarray(ref),
                               rtol=5e-2, atol=2e-2)
    print("KERNEL_OK")
</pallas_src>

<mosaic_0001>
module attributes {stable_mosaic.version = 11 : i64} {
  func.func @kernel(%arg0: i32, %arg1: memref<256x2xf32, #tpu.memory_space<vmem>>, %arg2: memref<4x2x8xbf16, #tpu.memory_space<vmem>>, %arg3: memref<1x8xf32, #tpu.memory_space<vmem>>, %arg4: memref<1x8xf32, #tpu.memory_space<vmem>>, %arg5: memref<128x1xf32, #tpu.memory_space<vmem>>, %arg6: memref<128x1xf32, #tpu.memory_space<vmem>>, %arg7: memref<4x8x16xbf16, #tpu.memory_space<vmem>>, %arg8: memref<1x16xf32, #tpu.memory_space<vmem>>, %arg9: memref<1x16xf32, #tpu.memory_space<vmem>>, %arg10: memref<64x1xf32, #tpu.memory_space<vmem>>, %arg11: memref<64x1xf32, #tpu.memory_space<vmem>>, %arg12: memref<64x16xf32, #tpu.memory_space<vmem>>, %arg13: memref<8x64xf32, #tpu.memory_space<vmem>>, %arg14: memref<1x1xf32, #tpu.memory_space<vmem>>, %arg15: memref<8x128xf32, #tpu.memory_space<vmem>>, %arg16: memref<258x2xf32, #tpu.memory_space<vmem>>, %arg17: memref<130x8xf32, #tpu.memory_space<vmem>>) attributes {dimension_semantics = [#tpu.dimension_semantics<arbitrary>], iteration_bounds = array<i64: 1>, scalar_prefetch = 0 : i64, scratch_operands = 2 : i64, tpu.core_type = #tpu.core_type<tc>, window_params = [{pipeline_mode = #tpu.pipeline_mode<synchronous>, transform_indices = @transform_0, window_bounds = array<i64: 256, 2>}, {pipeline_mode = #tpu.pipeline_mode<synchronous>, transform_indices = @transform_1, window_bounds = array<i64: 4, 2, 8>}, {pipeline_mode = #tpu.pipeline_mode<synchronous>, transform_indices = @transform_2, window_bounds = array<i64: 1, 8>}, {pipeline_mode = #tpu.pipeline_mode<synchronous>, transform_indices = @transform_3, window_bounds = array<i64: 1, 8>}, {pipeline_mode = #tpu.pipeline_mode<synchronous>, transform_indices = @transform_4, window_bounds = array<i64: 128, 1>}, {pipeline_mode = #tpu.pipeline_mode<synchronous>, transform_indices = @transform_5, window_bounds = array<i64: 128, 1>}, {pipeline_mode = #tpu.pipeline_mode<synchronous>, transform_indices = @transform_6, window_bounds = array<i64: 4, 8, 16>}, {pipeline_mode = #tpu.pipeline_mode<synchronous>, transform_indices = @transform_7, window_bounds = array<i64: 1, 16>}, {pipeline_mode = #tpu.pipeline_mode<synchronous>, transform_indices = @transform_8, window_bounds = array<i64: 1, 16>}, {pipeline_mode = #tpu.pipeline_mode<synchronous>, transform_indices = @transform_9, window_bounds = array<i64: 64, 1>}, {pipeline_mode = #tpu.pipeline_mode<synchronous>, transform_indices = @transform_10, window_bounds = array<i64: 64, 1>}, {pipeline_mode = #tpu.pipeline_mode<synchronous>, transform_indices = @transform_11, window_bounds = array<i64: 64, 16>}, {pipeline_mode = #tpu.pipeline_mode<synchronous>, transform_indices = @transform_12, window_bounds = array<i64: 8, 64>}, {pipeline_mode = #tpu.pipeline_mode<synchronous>, transform_indices = @transform_13, window_bounds = array<i64: 1, 1>}, {pipeline_mode = #tpu.pipeline_mode<synchronous>, transform_indices = @transform_14, window_bounds = array<i64: 8, 128>}]} {
    %c0 = arith.constant 0 : index
    %c0_0 = arith.constant 0 : index
    %0 = vector.load %arg1[%c0, %c0_0] : memref<256x2xf32, #tpu.memory_space<vmem>>, vector<256x2xf32>
    %cst = arith.constant 0.000000e+00 : f32
    %1 = vector.broadcast %cst : f32 to vector<1x2xf32>
    %c0_1 = arith.constant 0 : index
    %c0_2 = arith.constant 0 : index
    %2 = vector.load %arg16[%c0_1, %c0_2] : memref<258x2xf32, #tpu.memory_space<vmem>>, vector<1x2xf32>
    tpu.vector_store %arg16[%c0_1, %c0_2], %1 {strides = array<i32>} : memref<258x2xf32, #tpu.memory_space<vmem>>, vector<1x2xf32>,
    %cst_3 = arith.constant 0.000000e+00 : f32
    %3 = vector.broadcast %cst_3 : f32 to vector<1x2xf32>
    %c257 = arith.constant 257 : index
    %c0_4 = arith.constant 0 : index
    %4 = vector.load %arg16[%c257, %c0_4] : memref<258x2xf32, #tpu.memory_space<vmem>>, vector<1x2xf32>
    tpu.vector_store %arg16[%c257, %c0_4], %3 {strides = array<i32>} : memref<258x2xf32, #tpu.memory_space<vmem>>, vector<1x2xf32>,
    %c1 = arith.constant 1 : index
    %c0_5 = arith.constant 0 : index
    %5 = vector.load %arg16[%c1, %c0_5] : memref<258x2xf32, #tpu.memory_space<vmem>>, vector<256x2xf32>
    tpu.vector_store %arg16[%c1, %c0_5], %0 {strides = array<i32>} : memref<258x2xf32, #tpu.memory_space<vmem>>, vector<256x2xf32>,
    %c0_6 = arith.constant 0 : index
    %c0_7 = arith.constant 0 : index
    %6 = tpu.strided_load %arg16[%c0_6, %c0_7] {strides = array<i32: 2, 1>} : memref<258x2xf32, #tpu.memory_space<vmem>>, vector<128x2xf32>
    %c0_8 = arith.constant 0 : index
    %c0_9 = arith.constant 0 : index
    %7 = vector.load %arg5[%c0_8, %c0_9] : memref<128x1xf32, #tpu.memory_space<vmem>>, vector<128x1xf32>
    %8 = vector.broadcast %7 : vector<128x1xf32> to vector<128x2xf32>
    %9 = arith.mulf %6, %8 : vector<128x2xf32>
    %10 = arith.truncf %9 : vector<128x2xf32> to vector<128x2xbf16>
    %c0_10 = arith.constant 0 : index
    %c0_11 = arith.constant 0 : index
    %c0_12 = arith.constant 0 : index
    %11 = vector.load %arg2[%c0_10, %c0_11, %c0_12] : memref<4x2x8xbf16, #tpu.memory_space<vmem>>, vector<1x2x8xbf16>
    %12 = vector.shape_cast %11 : vector<1x2x8xbf16> to vector<2x8xbf16>
    %cst_13 = arith.constant dense<0.000000e+00> : vector<128x8xf32>
    %13 = tpu.matmul %10, %12, %cst_13 {dimension_numbers = #tpu.dot_dimension_numbers<[1], [0], [0], [1], [0, 0, 1, 1], [], []>} : vector<128x2xbf16>, vector<2x8xbf16>, vector<128x8xf32> -> vector<128x8xf32>
    %c1_14 = arith.constant 1 : index
    %c0_15 = arith.constant 0 : index
    %14 = tpu.strided_load %arg16[%c1_14, %c0_15] {strides = array<i32: 2, 1>} : memref<258x2xf32, #tpu.memory_space<vmem>>, vector<128x2xf32>
    %15 = arith.truncf %14 : vector<128x2xf32> to vector<128x2xbf16>
    %c1_16 = arith.constant 1 : index
    %c0_17 = arith.constant 0 : index
    %c0_18 = arith.constant 0 : index
    %16 = vector.load %arg2[%c1_16, %c0_17, %c0_18] : memref<4x2x8xbf16, #tpu.memory_space<vmem>>, vector<1x2x8xbf16>
    %17 = vector.shape_cast %16 : vector<1x2x8xbf16> to vector<2x8xbf16>
    %cst_19 = arith.constant dense<0.000000e+00> : vector<128x8xf32>
    %18 = tpu.matmul %15, %17, %cst_19 {dimension_numbers = #tpu.dot_dimension_numbers<[1], [0], [0], [1], [0, 0, 1, 1], [], []>} : vector<128x2xbf16>, vector<2x8xbf16>, vector<128x8xf32> -> vector<128x8xf32>
    %19 = arith.addf %13, %18 : vector<128x8xf32>
    %c2 = arith.constant 2 : index
    %c0_20 = arith.constant 0 : index
    %20 = tpu.strided_load %arg16[%c2, %c0_20] {strides = array<i32: 2, 1>} : memref<258x2xf32, #tpu.memory_space<vmem>>, vector<128x2xf32>
    %21 = arith.truncf %20 : vector<128x2xf32> to vector<128x2xbf16>
    %c2_21 = arith.constant 2 : index
    %c0_22 = arith.constant 0 : index
    %c0_23 = arith.constant 0 : index
    %22 = vector.load %arg2[%c2_21, %c0_22, %c0_23] : memref<4x2x8xbf16, #tpu.memory_space<vmem>>, vector<1x2x8xbf16>
    %23 = vector.shape_cast %22 : vector<1x2x8xbf16> to vector<2x8xbf16>
    %cst_24 = arith.constant dense<0.000000e+00> : vector<128x8xf32>
    %24 = tpu.matmul %21, %23, %cst_24 {dimension_numbers = #tpu.dot_dimension_numbers<[1], [0], [0], [1], [0, 0, 1, 1], [], []>} : vector<128x2xbf16>, vector<2x8xbf16>, vector<128x8xf32> -> vector<128x8xf32>
    %25 = arith.addf %19, %24 : vector<128x8xf32>
    %c3 = arith.constant 3 : index
    %c0_25 = arith.constant 0 : index
    %26 = tpu.strided_load %arg16[%c3, %c0_25] {strides = array<i32: 2, 1>} : memref<258x2xf32, #tpu.memory_space<vmem>>, vector<128x2xf32>
    %c0_26 = arith.constant 0 : index
    %c0_27 = arith.constant 0 : index
    %27 = vector.load %arg6[%c0_26, %c0_27] : memref<128x1xf32, #tpu.memory_space<vmem>>, vector<128x1xf32>
    %28 = vector.broadcast %27 : vector<128x1xf32> to vector<128x2xf32>
    %29 = arith.mulf %26, %28 : vector<128x2xf32>
    %30 = arith.truncf %29 : vector<128x2xf32> to vector<128x2xbf16>
    %c3_28 = arith.constant 3 : index
    %c0_29 = arith.constant 0 : index
    %c0_30 = arith.constant 0 : index
    %31 = vector.load %arg2[%c3_28, %c0_29, %c0_30] : memref<4x2x8xbf16, #tpu.memory_space<vmem>>, vector<1x2x8xbf16>
    %32 = vector.shape_cast %31 : vector<1x2x8xbf16> to vector<2x8xbf16>
    %cst_31 = arith.constant dense<0.000000e+00> : vector<128x8xf32>
    %33 = tpu.matmul %30, %32, %cst_31 {dimension_numbers = #tpu.dot_dimension_numbers<[1], [0], [0], [1], [0, 0, 1, 1], [], []>} : vector<128x2xbf16>, vector<2x8xbf16>, vector<128x8xf32> -> vector<128x8xf32>
    %34 = arith.addf %25, %33 : vector<128x8xf32>
    %cst_32 = arith.constant dense<0.000000e+00> : vector<8xf32>
    %35 = vector.multi_reduction <add>, %34, %cst_32 [0] : vector<128x8xf32> to vector<8xf32>
    %36 = vector.shape_cast %35 : vector<8xf32> to vector<1x8xf32>
    %cst_33 = arith.constant 7.812500e-03 : f32
    %37 = vector.broadcast %cst_33 : f32 to vector<1x8xf32>
    %38 = arith.mulf %36, %37 : vector<1x8xf32>
    %39 = vector.broadcast %38 : vector<1x8xf32> to vector<128x8xf32>
    %40 = arith.subf %34, %39 : vector<128x8xf32>
    %41 = arith.mulf %40, %40 : vector<128x8xf32>
    %cst_34 = arith.constant dense<0.000000e+00> : vector<8xf32>
    %42 = vector.multi_reduction <add>, %41, %cst_34 [0] : vector<128x8xf32> to vector<8xf32>
    %43 = vector.shape_cast %42 : vector<8xf32> to vector<1x8xf32>
    %cst_35 = arith.constant 7.812500e-03 : f32
    %44 = vector.broadcast %cst_35 : f32 to vector<1x8xf32>
    %45 = arith.mulf %43, %44 : vector<1x8xf32>
    %c0_36 = arith.constant 0 : index
    %c0_37 = arith.constant 0 : index
    %46 = vector.load %arg3[%c0_36, %c0_37] : memref<1x8xf32, #tpu.memory_space<vmem>>, vector<1x8xf32>
    %cst_38 = arith.constant 9.99999974E-6 : f32
    %47 = vector.broadcast %cst_38 : f32 to vector<1x8xf32>
    %48 = arith.addf %45, %47 : vector<1x8xf32>
    %49 = math.rsqrt %48 : vector<1x8xf32>
    %50 = arith.mulf %46, %49 : vector<1x8xf32>
    %51 = vector.broadcast %50 : vector<1x8xf32> to vector<128x8xf32>
    %52 = arith.mulf %40, %51 : vector<128x8xf32>
    %c0_39 = arith.constant 0 : index
    %c0_40 = arith.constant 0 : index
    %53 = vector.load %arg4[%c0_39, %c0_40] : memref<1x8xf32, #tpu.memory_space<vmem>>, vector<1x8xf32>
    %54 = vector.broadcast %53 : vector<1x8xf32> to vector<128x8xf32>
    %55 = arith.addf %52, %54 : vector<128x8xf32>
    %cst_41 = arith.constant 2.000000e-01 : f32
    %56 = vector.broadcast %cst_41 : f32 to vector<128x8xf32>
    %57 = arith.mulf %56, %55 : vector<128x8xf32>
    %58 = arith.maximumf %55, %57 : vector<128x8xf32>
    %cst_42 = arith.constant 0.000000e+00 : f32
    %59 = vector.broadcast %cst_42 : f32 to vector<1x8xf32>
    %c0_43 = arith.constant 0 : index
    %c0_44 = arith.constant 0 : index
    %60 = vector.load %arg17[%c0_43, %c0_44] : memref<130x8xf32, #tpu.memory_space<vmem>>, vector<1x8xf32>
    tpu.vector_store %arg17[%c0_43, %c0_44], %59 {strides = array<i32>} : memref<130x8xf32, #tpu.memory_space<vmem>>, vector<1x8xf32>,
    %cst_45 = arith.constant 0.000000e+00 : f32
    %61 = vector.broadcast %cst_45 : f32 to vector<1x8xf32>
    %c129 = arith.constant 129 : index
    %c0_46 = arith.constant 0 : index
    %62 = vector.load %arg17[%c129, %c0_46] : memref<130x8xf32, #tpu.memory_space<vmem>>, vector<1x8xf32>
    tpu.vector_store %arg17[%c129, %c0_46], %61 {strides = array<i32>} : memref<130x8xf32, #tpu.memory_space<vmem>>, vector<1x8xf32>,
    %c1_47 = arith.constant 1 : index
    %c0_48 = arith.constant 0 : index
    %63 = vector.load %arg17[%c1_47, %c0_48] : memref<130x8xf32, #tpu.memory_space<vmem>>, vector<128x8xf32>
    tpu.vector_store %arg17[%c1_47, %c0_48], %58 {strides = array<i32>} : memref<130x8xf32, #tpu.memory_space<vmem>>, vector<128x8xf32>,
    %c0_49 = arith.constant 0 : index
    %c0_50 = arith.constant 0 : index
    %64 = tpu.strided_load %arg17[%c0_49, %c0_50] {strides = array<i32: 2, 1>} : memref<130x8xf32, #tpu.memory_space<vmem>>, vector<64x8xf32>
    %c0_51 = arith.constant 0 : index
    %c0_52 = arith.constant 0 : index
    %65 = vector.load %arg10[%c0_51, %c0_52] : memref<64x1xf32, #tpu.memory_space<vmem>>, vector<64x1xf32>
    %66 = vector.broadcast %65 : vector<64x1xf32> to vector<64x8xf32>
    %67 = arith.mulf %64, %66 : vector<64x8xf32>
    %68 = arith.truncf %67 : vector<64x8xf32> to vector<64x8xbf16>
    %c0_53 = arith.constant 0 : index
    %c0_54 = arith.constant 0 : index
    %c0_55 = arith.constant 0 : index
    %69 = vector.load %arg7[%c0_53, %c0_54, %c0_55] : memref<4x8x16xbf16, #tpu.memory_space<vmem>>, vector<1x8x16xbf16>
    %70 = vector.shape_cast %69 : vector<1x8x16xbf16> to vector<8x16xbf16>
    %cst_56 = arith.constant dense<0.000000e+00> : vector<64x16xf32>
    %71 = tpu.matmul %68, %70, %cst_56 {dimension_numbers = #tpu.dot_dimension_numbers<[1], [0], [0], [1], [0, 0, 1, 1], [], []>} : vector<64x8xbf16>, vector<8x16xbf16>, vector<64x16xf32> -> vector<64x16xf32>
    %c1_57 = arith.constant 1 : index
    %c0_58 = arith.constant 0 : index
    %72 = tpu.strided_load %arg17[%c1_57, %c0_58] {strides = array<i32: 2, 1>} : memref<130x8xf32, #tpu.memory_space<vmem>>, vector<64x8xf32>
    %73 = arith.truncf %72 : vector<64x8xf32> to vector<64x8xbf16>
    %c1_59 = arith.constant 1 : index
    %c0_60 = arith.constant 0 : index
    %c0_61 = arith.constant 0 : index
    %74 = vector.load %arg7[%c1_59, %c0_60, %c0_61] : memref<4x8x16xbf16, #tpu.memory_space<vmem>>, vector<1x8x16xbf16>
    %75 = vector.shape_cast %74 : vector<1x8x16xbf16> to vector<8x16xbf16>
    %cst_62 = arith.constant dense<0.000000e+00> : vector<64x16xf32>
    %76 = tpu.matmul %73, %75, %cst_62 {dimension_numbers = #tpu.dot_dimension_numbers<[1], [0], [0], [1], [0, 0, 1, 1], [], []>} : vector<64x8xbf16>, vector<8x16xbf16>, vector<64x16xf32> -> vector<64x16xf32>
    %77 = arith.addf %71, %76 : vector<64x16xf32>
    %c2_63 = arith.constant 2 : index
    %c0_64 = arith.constant 0 : index
    %78 = tpu.strided_load %arg17[%c2_63, %c0_64] {strides = array<i32: 2, 1>} : memref<130x8xf32, #tpu.memory_space<vmem>>, vector<64x8xf32>
    %79 = arith.truncf %78 : vector<64x8xf32> to vector<64x8xbf16>
    %c2_65 = arith.constant 2 : index
    %c0_66 = arith.constant 0 : index
    %c0_67 = arith.constant 0 : index
    %80 = vector.load %arg7[%c2_65, %c0_66, %c0_67] : memref<4x8x16xbf16, #tpu.memory_space<vmem>>, vector<1x8x16xbf16>
    %81 = vector.shape_cast %80 : vector<1x8x16xbf16> to vector<8x16xbf16>
    %cst_68 = arith.constant dense<0.000000e+00> : vector<64x16xf32>
    %82 = tpu.matmul %79, %81, %cst_68 {dimension_numbers = #tpu.dot_dimension_numbers<[1], [0], [0], [1], [0, 0, 1, 1], [], []>} : vector<64x8xbf16>, vector<8x16xbf16>, vector<64x16xf32> -> vector<64x16xf32>
    %83 = arith.addf %77, %82 : vector<64x16xf32>
    %c3_69 = arith.constant 3 : index
    %c0_70 = arith.constant 0 : index
    %84 = tpu.strided_load %arg17[%c3_69, %c0_70] {strides = array<i32: 2, 1>} : memref<130x8xf32, #tpu.memory_space<vmem>>, vector<64x8xf32>
    %c0_71 = arith.constant 0 : index
    %c0_72 = arith.constant 0 : index
    %85 = vector.load %arg11[%c0_71, %c0_72] : memref<64x1xf32, #tpu.memory_space<vmem>>, vector<64x1xf32>
    %86 = vector.broadcast %85 : vector<64x1xf32> to vector<64x8xf32>
    %87 = arith.mulf %84, %86 : vector<64x8xf32>
    %88 = arith.truncf %87 : vector<64x8xf32> to vector<64x8xbf16>
    %c3_73 = arith.constant 3 : index
    %c0_74 = arith.constant 0 : index
    %c0_75 = arith.constant 0 : index
    %89 = vector.load %arg7[%c3_73, %c0_74, %c0_75] : memref<4x8x16xbf16, #tpu.memory_space<vmem>>, vector<1x8x16xbf16>
    %90 = vector.shape_cast %89 : vector<1x8x16xbf16> to vector<8x16xbf16>
    %cst_76 = arith.constant dense<0.000000e+00> : vector<64x16xf32>
    %91 = tpu.matmul %88, %90, %cst_76 {dimension_numbers = #tpu.dot_dimension_numbers<[1], [0], [0], [1], [0, 0, 1, 1], [], []>} : vector<64x8xbf16>, vector<8x16xbf16>, vector<64x16xf32> -> vector<64x16xf32>
    %92 = arith.addf %83, %91 : vector<64x16xf32>
    %cst_77 = arith.constant dense<0.000000e+00> : vector<16xf32>
    %93 = vector.multi_reduction <add>, %92, %cst_77 [0] : vector<64x16xf32> to vector<16xf32>
    %94 = vector.shape_cast %93 : vector<16xf32> to vector<1x16xf32>
    %cst_78 = arith.constant 1.562500e-02 : f32
    %95 = vector.broadcast %cst_78 : f32 to vector<1x16xf32>
    %96 = arith.mulf %94, %95 : vector<1x16xf32>
    %97 = vector.broadcast %96 : vector<1x16xf32> to vector<64x16xf32>
    %98 = arith.subf %92, %97 : vector<64x16xf32>
    %99 = arith.mulf %98, %98 : vector<64x16xf32>
    %cst_79 = arith.constant dense<0.000000e+00> : vector<16xf32>
    %100 = vector.multi_reduction <add>, %99, %cst_79 [0] : vector<64x16xf32> to vector<16xf32>
    %101 = vector.shape_cast %100 : vector<16xf32> to vector<1x16xf32>
    %cst_80 = arith.constant 1.562500e-02 : f32
    %102 = vector.broadcast %cst_80 : f32 to vector<1x16xf32>
    %103 = arith.mulf %101, %102 : vector<1x16xf32>
    %c0_81 = arith.constant 0 : index
    %c0_82 = arith.constant 0 : index
    %104 = vector.load %arg8[%c0_81, %c0_82] : memref<1x16xf32, #tpu.memory_space<vmem>>, vector<1x16xf32>
    %cst_83 = arith.constant 9.99999974E-6 : f32
    %105 = vector.broadcast %cst_83 : f32 to vector<1x16xf32>
    %106 = arith.addf %103, %105 : vector<1x16xf32>
    %107 = math.rsqrt %106 : vector<1x16xf32>
    %108 = arith.mulf %104, %107 : vector<1x16xf32>
    %109 = vector.broadcast %108 : vector<1x16xf32> to vector<64x16xf32>
    %110 = arith.mulf %98, %109 : vector<64x16xf32>
    %c0_84 = arith.constant 0 : index
    %c0_85 = arith.constant 0 : index
    %111 = vector.load %arg9[%c0_84, %c0_85] : memref<1x16xf32, #tpu.memory_space<vmem>>, vector<1x16xf32>
    %112 = vector.broadcast %111 : vector<1x16xf32> to vector<64x16xf32>
    %113 = arith.addf %110, %112 : vector<64x16xf32>
    %cst_86 = arith.constant 2.000000e-01 : f32
    %114 = vector.broadcast %cst_86 : f32 to vector<64x16xf32>
    %115 = arith.mulf %114, %113 : vector<64x16xf32>
    %116 = arith.maximumf %113, %115 : vector<64x16xf32>
    %c0_87 = arith.constant 0 : index
    %c0_88 = arith.constant 0 : index
    %117 = vector.load %arg12[%c0_87, %c0_88] : memref<64x16xf32, #tpu.memory_space<vmem>>, vector<64x16xf32>
    %118 = arith.mulf %116, %117 : vector<64x16xf32>
    %c0_89 = arith.constant 0 : index
    %c0_90 = arith.constant 0 : index
    %119 = vector.load %arg13[%c0_89, %c0_90] : memref<8x64xf32, #tpu.memory_space<vmem>>, vector<8x64xf32>
    %cst_91 = arith.constant dense<0.000000e+00> : vector<8x16xf32>
    %120 = tpu.matmul %119, %118, %cst_91 {dimension_numbers = #tpu.dot_dimension_numbers<[1], [0], [0], [1], [0, 0, 1, 1], [], []>} : vector<8x64xf32>, vector<64x16xf32>, vector<8x16xf32> -> vector<8x16xf32>
    %cst_92 = arith.constant dense<0.000000e+00> : vector<8xf32>
    %121 = vector.multi_reduction <add>, %120, %cst_92 [1] : vector<8x16xf32> to vector<8xf32>
    %122 = vector.shape_cast %121 : vector<8xf32> to vector<8x1xf32>
    %c0_93 = arith.constant 0 : index
    %c0_94 = arith.constant 0 : index
    %123 = vector.load %arg14[%c0_93, %c0_94] : memref<1x1xf32, #tpu.memory_space<vmem>>, vector<1x1xf32>
    %124 = vector.broadcast %123 : vector<1x1xf32> to vector<8x1xf32>
    %125 = arith.addf %122, %124 : vector<8x1xf32>
    %cst_95 = arith.constant 0.000000e+00 : f32
    %126 = vector.broadcast %cst_95 : f32 to vector<8x1xf32>
    %127 = arith.subf %126, %125 : vector<8x1xf32>
    %128 = math.exp %127 : vector<8x1xf32>
    %cst_96 = arith.constant 1.000000e+00 : f32
    %129 = vector.broadcast %cst_96 : f32 to vector<8x1xf32>
    %130 = arith.addf %129, %128 : vector<8x1xf32>
    %cst_97 = arith.constant 1.000000e+00 : f32
    %131 = vector.broadcast %cst_97 : f32 to vector<8x1xf32>
    %132 = arith.divf %131, %130 : vector<8x1xf32>
    %133 = vector.shape_cast %132 : vector<8x1xf32> to vector<8x1xf32>
    %134 = vector.broadcast %133 : vector<8x1xf32> to vector<8x128xf32>
    %c0_98 = arith.constant 0 : index
    %c0_99 = arith.constant 0 : index
    %135 = vector.load %arg15[%c0_98, %c0_99] : memref<8x128xf32, #tpu.memory_space<vmem>>, vector<8x128xf32>
    tpu.vector_store %arg15[%c0_98, %c0_99], %134 {strides = array<i32>} : memref<8x128xf32, #tpu.memory_space<vmem>>, vector<8x128xf32>,
    return
  }
  func.func @transform_0(%arg0: i32) -> (i32, i32) {
    %c0_i32 = arith.constant 0 : i32
    %c0_i32_0 = arith.constant 0 : i32
    %c0_i32_1 = arith.constant 0 : i32
    return %c0_i32, %c0_i32_0 : i32, i32
  }
  func.func @transform_1(%arg0: i32) -> (i32, i32, i32) {
    %c0_i32 = arith.constant 0 : i32
    %c0_i32_0 = arith.constant 0 : i32
    %c0_i32_1 = arith.constant 0 : i32
    %c0_i32_2 = arith.constant 0 : i32
    return %c0_i32, %c0_i32_0, %c0_i32_1 : i32, i32, i32
  }
  func.func @transform_2(%arg0: i32) -> (i32, i32) {
    %c0_i32 = arith.constant 0 : i32
    %c0_i32_0 = arith.constant 0 : i32
    %c0_i32_1 = arith.constant 0 : i32
    return %c0_i32, %c0_i32_0 : i32, i32
  }
  func.func @transform_3(%arg0: i32) -> (i32, i32) {
    %c0_i32 = arith.constant 0 : i32
    %c0_i32_0 = arith.constant 0 : i32
    %c0_i32_1 = arith.constant 0 : i32
    return %c0_i32, %c0_i32_0 : i32, i32
  }
  func.func @transform_4(%arg0: i32) -> (i32, i32) {
    %c0_i32 = arith.constant 0 : i32
    %c0_i32_0 = arith.constant 0 : i32
    %c0_i32_1 = arith.constant 0 : i32
    return %c0_i32, %c0_i32_0 : i32, i32
  }
  func.func @transform_5(%arg0: i32) -> (i32, i32) {
    %c0_i32 = arith.constant 0 : i32
    %c0_i32_0 = arith.constant 0 : i32
    %c0_i32_1 = arith.constant 0 : i32
    return %c0_i32, %c0_i32_0 : i32, i32
  }
  func.func @transform_6(%arg0: i32) -> (i32, i32, i32) {
    %c0_i32 = arith.constant 0 : i32
    %c0_i32_0 = arith.constant 0 : i32
    %c0_i32_1 = arith.constant 0 : i32
    %c0_i32_2 = arith.constant 0 : i32
    return %c0_i32, %c0_i32_0, %c0_i32_1 : i32, i32, i32
  }
  func.func @transform_7(%arg0: i32) -> (i32, i32) {
    %c0_i32 = arith.constant 0 : i32
    %c0_i32_0 = arith.constant 0 : i32
    %c0_i32_1 = arith.constant 0 : i32
    return %c0_i32, %c0_i32_0 : i32, i32
  }
  func.func @transform_8(%arg0: i32) -> (i32, i32) {
    %c0_i32 = arith.constant 0 : i32
    %c0_i32_0 = arith.constant 0 : i32
    %c0_i32_1 = arith.constant 0 : i32
    return %c0_i32, %c0_i32_0 : i32, i32
  }
  func.func @transform_9(%arg0: i32) -> (i32, i32) {
    %c0_i32 = arith.constant 0 : i32
    %c0_i32_0 = arith.constant 0 : i32
    %c0_i32_1 = arith.constant 0 : i32
    return %c0_i32, %c0_i32_0 : i32, i32
  }
  func.func @transform_10(%arg0: i32) -> (i32, i32) {
    %c0_i32 = arith.constant 0 : i32
    %c0_i32_0 = arith.constant 0 : i32
    %c0_i32_1 = arith.constant 0 : i32
    return %c0_i32, %c0_i32_0 : i32, i32
  }
  func.func @transform_11(%arg0: i32) -> (i32, i32) {
    %c0_i32 = arith.constant 0 : i32
    %c0_i32_0 = arith.constant 0 : i32
    %c0_i32_1 = arith.constant 0 : i32
    return %c0_i32, %c0_i32_0 : i32, i32
  }
  func.func @transform_12(%arg0: i32) -> (i32, i32) {
    %c0_i32 = arith.constant 0 : i32
    %c0_i32_0 = arith.constant 0 : i32
    %c0_i32_1 = arith.constant 0 : i32
    return %c0_i32, %c0_i32_0 : i32, i32
  }
  func.func @transform_13(%arg0: i32) -> (i32, i32) {
    %c0_i32 = arith.constant 0 : i32
    %c0_i32_0 = arith.constant 0 : i32
    %c0_i32_1 = arith.constant 0 : i32
    return %c0_i32, %c0_i32_0 : i32, i32
  }
  func.func @transform_14(%arg0: i32) -> (i32, i32) {
    %c0_i32 = arith.constant 0 : i32
    %c0_i32_0 = arith.constant 0 : i32
    %c0_i32_1 = arith.constant 0 : i32
    return %c0_i32, %c0_i32_0 : i32, i32
  }
}

</mosaic_0001>

<llo_original>
// kernel: tpu_custom_call.1
$region0: #{tpu_custom_call.1}
  #allocation0 [shape = 'u32[]', space=smem, size = 0x4, offset = 0x4, fixed_abs, tag = 'smem constant byte address 0x4 - core index']
  #allocation1 [shape = 'u32[144,128]{1,0:T(1,128)}', space=vmem, size = 0x12000, scoped, tag = 'internal scratch']
  #allocation2 [shape = 'f32[258,2]{1,0:T(8,128)}', space=vmem, size = 0x21000, scoped, tag = 'scratch operand']
  #allocation3 [shape = 'f32[130,8]{1,0:T(8,128)}', space=vmem, size = 0x11000, scoped, tag = 'scratch operand']
  #allocation4 [shape = 'f32[1,1]{1,0:T(1,128)S(1)}', space=vmem, size = 0x200, scoped, tag = 'scoped memory for tpu_custom_call.1']
  %s0 = inlined_call_operand.vmem [shape: f32[256,2], index: 0, kind: input, shape index: {}]
  %s1 = inlined_call_operand.vmem [shape: bf16[4,2,8], index: 1, kind: input, shape index: {}]
  %s2 = inlined_call_operand.vmem [shape: f32[1,8], index: 2, kind: input, shape index: {}]
  %s3 = inlined_call_operand.vmem [shape: f32[1,8], index: 3, kind: input, shape index: {}]
  %s4 = inlined_call_operand.vmem [shape: f32[128,1], index: 4, kind: input, shape index: {}]
  %s5 = inlined_call_operand.vmem [shape: f32[128,1], index: 5, kind: input, shape index: {}]
  %s6 = inlined_call_operand.vmem [shape: bf16[4,8,16], index: 6, kind: input, shape index: {}]
  %s7 = inlined_call_operand.vmem [shape: f32[1,16], index: 7, kind: input, shape index: {}]
  %s8 = inlined_call_operand.vmem [shape: f32[1,16], index: 8, kind: input, shape index: {}]
  %s9 = inlined_call_operand.vmem [shape: f32[64,1], index: 9, kind: input, shape index: {}]
  %s10 = inlined_call_operand.vmem [shape: f32[64,1], index: 10, kind: input, shape index: {}]
  %s11 = inlined_call_operand.vmem [shape: f32[64,16], index: 11, kind: input, shape index: {}]
  %s12 = inlined_call_operand.vmem [shape: f32[8,64], index: 12, kind: input, shape index: {}]
  %s13 = inlined_call_operand.<no memory space> [shape: f32[1,1], index: 13, kind: input, shape index: {}]
  %s14 = inlined_call_operand.hbm [shape: f32[8,128], index: 14, kind: output, shape index: {}]
  %s15 = sld [smem:[#allocation0]]
  $region66: #{tpu_custom_call.1} parent=0
    _
  %s17 = ssub.s32 1, %s15
  %s18 = scalar_select 0, %s17, %s15
  %v19 = vstv %s13
  %20 = vst [vmem:[#allocation4] sm:$0x1] %v19
  $region1: #{tpu_custom_call.1} parent=0
    #allocation5 [shape = 'u8[4096]{0}', space=vmem, size = 0x1000, scoped, tag = 'output window, operand 0, single buffered']
    #allocation6 [shape = 's32[1]{0}', space=sflag, size = 0x4, scoped, tag = 'scoped memory for tpu_custom_call.1']
    %21 = vsyncpa [#allocation6], 0
    // Predicated region
    $region2: #{tpu_custom_call.1} parent=1 // pred_check
      _
    $region3: #{tpu_custom_call.1} parent=1 // pred_check_branch
      %23 = sbr.rel (0) target = $region5
    $region4: #{tpu_custom_call.1} parent=1 // pred_region
      _
    $region5: #{tpu_custom_call.1} parent=1 // pred_fallthru
      _
    // Predicated region
    $region6: #{tpu_custom_call.1} parent=1 // pred_check
      _
    $region7: #{tpu_custom_call.1} parent=1 // pred_check_branch
      %25 = sbr.rel (0) target = $region9
    $region8: #{tpu_custom_call.1} parent=1 // pred_region
      _
    $region9: #{tpu_custom_call.1} parent=1 // pred_fallthru
      _
    // Predicated region
    $region10: #{tpu_custom_call.1} parent=1 // pred_check
      _
    $region11: #{tpu_custom_call.1} parent=1 // pred_check_branch
      %27 = sbr.rel (0) target = $region13
    $region12: #{tpu_custom_call.1} parent=1 // pred_region
      _
    $region13: #{tpu_custom_call.1} parent=1 // pred_fallthru
      _
    // Predicated region
    $region14: #{tpu_custom_call.1} parent=1 // pred_check
      _
    $region15: #{tpu_custom_call.1} parent=1 // pred_check_branch
      %29 = sbr.rel (0) target = $region17
    $region16: #{tpu_custom_call.1} parent=1 // pred_region
      _
    $region17: #{tpu_custom_call.1} parent=1 // pred_fallthru
      _
    // Predicated region
    $region18: #{tpu_custom_call.1} parent=1 // pred_check
      _
    $region19: #{tpu_custom_call.1} parent=1 // pred_check_branch
      %31 = sbr.rel (0) target = $region21
    $region20: #{tpu_custom_call.1} parent=1 // pred_region
      _
    $region21: #{tpu_custom_call.1} parent=1 // pred_fallthru
      _
    // Predicated region
    $region22: #{tpu_custom_call.1} parent=1 // pred_check
      _
    $region23: #{tpu_custom_call.1} parent=1 // pred_check_branch
      %33 = sbr.rel (0) target = $region25
    $region24: #{tpu_custom_call.1} parent=1 // pred_region
      _
    $region25: #{tpu_custom_call.1} parent=1 // pred_fallthru
      _
    // Predicated region
    $region26: #{tpu_custom_call.1} parent=1 // pred_check
      _
    $region27: #{tpu_custom_call.1} parent=1 // pred_check_branch
      %35 = sbr.rel (0) target = $region29
    $region28: #{tpu_custom_call.1} parent=1 // pred_region
      _
    $region29: #{tpu_custom_call.1} parent=1 // pred_fallthru
      _
    // Predicated region
    $region30: #{tpu_custom_call.1} parent=1 // pred_check
      _
    $region31: #{tpu_custom_call.1} parent=1 // pred_check_branch
      %37 = sbr.rel (0) target = $region33
    $region32: #{tpu_custom_call.1} parent=1 // pred_region
      _
    $region33: #{tpu_custom_call.1} parent=1 // pred_fallthru
      _
    // Predicated region
    $region34: #{tpu_custom_call.1} parent=1 // pred_check
      _
    $region35: #{tpu_custom_call.1} parent=1 // pred_check_branch
      %39 = sbr.rel (0) target = $region37
    $region36: #{tpu_custom_call.1} parent=1 // pred_region
      _
    $region37: #{tpu_custom_call.1} parent=1 // pred_fallthru
      _
    // Predicated region
    $region38: #{tpu_custom_call.1} parent=1 // pred_check
      _
    $region39: #{tpu_custom_call.1} parent=1 // pred_check_branch
      %41 = sbr.rel (0) target = $region41
    $region40: #{tpu_custom_call.1} parent=1 // pred_region
      _
    $region41: #{tpu_custom_call.1} parent=1 // pred_fallthru
      _
    // Predicated region
    $region42: #{tpu_custom_call.1} parent=1 // pred_check
      _
    $region43: #{tpu_custom_call.1} parent=1 // pred_check_branch
      %43 = sbr.rel (0) target = $region45
    $region44: #{tpu_custom_call.1} parent=1 // pred_region
      _
    $region45: #{tpu_custom_call.1} parent=1 // pred_fallthru
      _
    // Predicated region
    $region46: #{tpu_custom_call.1} parent=1 // pred_check
      _
    $region47: #{tpu_custom_call.1} parent=1 // pred_check_branch
      %45 = sbr.rel (0) target = $region49
    $region48: #{tpu_custom_call.1} parent=1 // pred_region
      _
    $region49: #{tpu_custom_call.1} parent=1 // pred_fallthru
      _
    // Predicated region
    $region50: #{tpu_custom_call.1} parent=1 // pred_check
      _
    $region51: #{tpu_custom_call.1} parent=1 // pred_check_branch
      %47 = sbr.rel (0) target = $region53
    $region52: #{tpu_custom_call.1} parent=1 // pred_region
      _
    $region53: #{tpu_custom_call.1} parent=1 // pred_fallthru
      _
    // Predicated region
    $region54: #{tpu_custom_call.1} parent=1 // pred_check
      _
    $region55: #{tpu_custom_call.1} parent=1 // pred_check_branch
      %49 = sbr.rel (0) target = $region57
    $region56: #{tpu_custom_call.1} parent=1 // pred_region
      _
    $region57: #{tpu_custom_call.1} parent=1 // pred_fallthru
      _
    %v51 = vld [vmem:[%s0] sm:$0xff]
    %v52 = vld [vmem:[%s0 + $0x8] sm:$0xff]
    %v53 = vld [vmem:[%s0 + $0x10] sm:$0xff]
    %v54 = vld [vmem:[%s0 + $0x18] sm:$0xff]
    %v55 = vld [vmem:[%s0 + $0x20] sm:$0xff]
    %v56 = vld [vmem:[%s0 + $0x28] sm:$0xff]
    %v57 = vld [vmem:[%s0 + $0x30] sm:$0xff]
    %v58 = vld [vmem:[%s0 + $0x38] sm:$0xff]
    %v59 = vld [vmem:[%s0 + $0x40] sm:$0xff]
    %v60 = vld [vmem:[%s0 + $0x48] sm:$0xff]
    %v61 = vld [vmem:[%s0 + $0x50] sm:$0xff]
    %v62 = vld [vmem:[%s0 + $0x58] sm:$0xff]
    %v63 = vld [vmem:[%s0 + $0x60] sm:$0xff]
    %v64 = vld [vmem:[%s0 + $0x68] sm:$0xff]
    %v65 = vld [vmem:[%s0 + $0x70] sm:$0xff]
    %v66 = vld [vmem:[%s0 + $0x78] sm:$0xff]
    %v67 = vld [vmem:[%s0 + $0x80] sm:$0xff]
    %v68 = vld [vmem:[%s0 + $0x88] sm:$0xff]
    %v69 = vld [vmem:[%s0 + $0x90] sm:$0xff]
    %v70 = vld [vmem:[%s0 + $0x98] sm:$0xff]
    %v71 = vld [vmem:[%s0 + $0xa0] sm:$0xff]
    %v72 = vld [vmem:[%s0 + $0xa8] sm:$0xff]
    %v73 = vld [vmem:[%s0 + $0xb0] sm:$0xff]
    %v74 = vld [vmem:[%s0 + $0xb8] sm:$0xff]
    %v75 = vld [vmem:[%s0 + $0xc0] sm:$0xff]
    %v76 = vld [vmem:[%s0 + $0xc8] sm:$0xff]
    %v77 = vld [vmem:[%s0 + $0xd0] sm:$0xff]
    %v78 = vld [vmem:[%s0 + $0xd8] sm:$0xff]
    %v79 = vld [vmem:[%s0 + $0xe0] sm:$0xff]
    %v80 = vld [vmem:[%s0 + $0xe8] sm:$0xff]
    %v81 = vld [vmem:[%s0 + $0xf0] sm:$0xff]
    %v82 = vld [vmem:[%s0 + $0xf8] sm:$0xff]
    %vm83 = vcmask 8192
    %84 = vst.msk [vmem:[#allocation2] sm:$0x1] %vm83, 0.0
    %85 = vst.msk [vmem:[#allocation2 + $0x101] sm:$0x1] %vm83, 0.0
    %vm86 = vcmask 15360
    %87 = vst.msk [vmem:[#allocation2 + $0x1] sm:$0xff] %vm86, %v51
    %88 = vst.msk [vmem:[#allocation2 + $0x9] sm:$0xff] %vm86, %v52
    %89 = vst.msk [vmem:[#allocation2 + $0x11] sm:$0xff] %vm86, %v53
    %90 = vst.msk [vmem:[#allocation2 + $0x19] sm:$0xff] %vm86, %v54
    %91 = vst.msk [vmem:[#allocation2 + $0x21] sm:$0xff] %vm86, %v55
    %92 = vst.msk [vmem:[#allocation2 + $0x29] sm:$0xff] %vm86, %v56
    %93 = vst.msk [vmem:[#allocation2 + $0x31] sm:$0xff] %vm86, %v57
    %94 = vst.msk [vmem:[#allocation2 + $0x39] sm:$0xff] %vm86, %v58
    %95 = vst.msk [vmem:[#allocation2 + $0x41] sm:$0xff] %vm86, %v59
    %96 = vst.msk [vmem:[#allocation2 + $0x49] sm:$0xff] %vm86, %v60
    %97 = vst.msk [vmem:[#allocation2 + $0x51] sm:$0xff] %vm86, %v61
    %98 = vst.msk [vmem:[#allocation2 + $0x59] sm:$0xff] %vm86, %v62
    %99 = vst.msk [vmem:[#allocation2 + $0x61] sm:$0xff] %vm86, %v63
    %100 = vst.msk [vmem:[#allocation2 + $0x69] sm:$0xff] %vm86, %v64
    %101 = vst.msk [vmem:[#allocation2 + $0x71] sm:$0xff] %vm86, %v65
    %102 = vst.msk [vmem:[#allocation2 + $0x79] sm:$0xff] %vm86, %v66
    %103 = vst.msk [vmem:[#allocation2 + $0x81] sm:$0xff] %vm86, %v67
    %104 = vst.msk [vmem:[#allocation2 + $0x89] sm:$0xff] %vm86, %v68
    %105 = vst.msk [vmem:[#allocation2 + $0x91] sm:$0xff] %vm86, %v69
    %106 = vst.msk [vmem:[#allocation2 + $0x99] sm:$0xff] %vm86, %v70
    %107 = vst.msk [vmem:[#allocation2 + $0xa1] sm:$0xff] %vm86, %v71
    %108 = vst.msk [vmem:[#allocation2 + $0xa9] sm:$0xff] %vm86, %v72
    %109 = vst.msk [vmem:[#allocation2 + $0xb1] sm:$0xff] %vm86, %v73
    %110 = vst.msk [vmem:[#allocation2 + $0xb9] sm:$0xff] %vm86, %v74
    %111 = vst.msk [vmem:[#allocation2 + $0xc1] sm:$0xff] %vm86, %v75
    %112 = vst.msk [vmem:[#allocation2 + $0xc9] sm:$0xff] %vm86, %v76
    %113 = vst.msk [vmem:[#allocation2 + $0xd1] sm:$0xff] %vm86, %v77
    %114 = vst.msk [vmem:[#allocation2 + $0xd9] sm:$0xff] %vm86, %v78
    %115 = vst.msk [vmem:[#allocation2 + $0xe1] sm:$0xff] %vm86, %v79
    %116 = vst.msk [vmem:[#allocation2 + $0xe9] sm:$0xff] %vm86, %v80
    %117 = vst.msk [vmem:[#allocation2 + $0xf1] sm:$0xff] %vm86, %v81
    %118 = vst.msk [vmem:[#allocation2 + $0xf9] sm:$0xff] %vm86, %v82
    %v119 = vld [vmem:[#allocation2] ss:$2 sm:$0xff]
    %s120 = scalar_lea.vmem [#allocation2], 16
    %v121 = vld [vmem:[%s120] ss:$2 sm:$0xff]
    %s122 = scalar_lea.vmem [#allocation2], 32
    %v123 = vld [vmem:[%s122] ss:$2 sm:$0xff]
    %s124 = scalar_lea.vmem [#allocation2], 48
    %v125 = vld [vmem:[%s124] ss:$2 sm:$0xff]
    %s126 = scalar_lea.vmem [#allocation2], 64
    %v127 = vld [vmem:[%s126] ss:$2 sm:$0xff]
    %s128 = scalar_lea.vmem [#allocation2], 80
    %v129 = vld [vmem:[%s128] ss:$2 sm:$0xff]
    %s130 = scalar_lea.vmem [#allocation2], 96
    %v131 = vld [vmem:[%s130] ss:$2 sm:$0xff]
    %s132 = scalar_lea.vmem [#allocation2], 112
    %v133 = vld [vmem:[%s132] ss:$2 sm:$0xff]
    %s134 = scalar_lea.vmem [#allocation2], 128
    %v135 = vld [vmem:[%s134] ss:$2 sm:$0xff]
    %s136 = scalar_lea.vmem [#allocation2], 144
    %v137 = vld [vmem:[%s136] ss:$2 sm:$0xff]
    %s138 = scalar_lea.vmem [#allocation2], 160
    %v139 = vld [vmem:[%s138] ss:$2 sm:$0xff]
    %s140 = scalar_lea.vmem [#allocation2], 176
    %v141 = vld [vmem:[%s140] ss:$2 sm:$0xff]
    %s142 = scalar_lea.vmem [#allocation2], 192
    %v143 = vld [vmem:[%s142] ss:$2 sm:$0xff]
    %s144 = scalar_lea.vmem [#allocation2], 208
    %v145 = vld [vmem:[%s144] ss:$2 sm:$0xff]
    %s146 = scalar_lea.vmem [#allocation2], 224
    %v147 = vld [vmem:[%s146] ss:$2 sm:$0xff]
    %s148 = scalar_lea.vmem [#allocation2], 240
    %v149 = vld [vmem:[%s148] ss:$2 sm:$0xff]
    %v150 = vld [vmem:[%s4] sm:$0xff]
    %v151 = vld [vmem:[%s4 + $0x8] sm:$0xff]
    %v152 = vld [vmem:[%s4 + $0x10] sm:$0xff]
    %v153 = vld [vmem:[%s4 + $0x18] sm:$0xff]
    %v154 = vld [vmem:[%s4 + $0x20] sm:$0xff]
    %v155 = vld [vmem:[%s4 + $0x28] sm:$0xff]
    %v156 = vld [vmem:[%s4 + $0x30] sm:$0xff]
    %v157 = vld [vmem:[%s4 + $0x38] sm:$0xff]
    %v158 = vld [vmem:[%s4 + $0x40] sm:$0xff]
    %v159 = vld [vmem:[%s4 + $0x48] sm:$0xff]
    %v160 = vld [vmem:[%s4 + $0x50] sm:$0xff]
    %v161 = vld [vmem:[%s4 + $0x58] sm:$0xff]
    %v162 = vld [vmem:[%s4 + $0x60] sm:$0xff]
    %v163 = vld [vmem:[%s4 + $0x68] sm:$0xff]
    %v164 = vld [vmem:[%s4 + $0x70] sm:$0xff]
    %v165 = vld [vmem:[%s4 + $0x78] sm:$0xff]
    %167 = vset.pattern.permute.xlu0 0
    %168 = vperm.xlu0 %167, %v150
    %v169 = vpop.permute.xlu0 %168
    %172 = vset.pattern.permute.xlu0 0
    %173 = vperm.xlu0 %172, %v151
    %v174 = vpop.permute.xlu0 %173
    %177 = vset.pattern.permute.xlu0 0
    %178 = vperm.xlu0 %177, %v152
    %v179 = vpop.permute.xlu0 %178
    %182 = vset.pattern.permute.xlu0 0
    %183 = vperm.xlu0 %182, %v153
    %v184 = vpop.permute.xlu0 %183
    %187 = vset.pattern.permute.xlu0 0
    %188 = vperm.xlu0 %187, %v154
    %v189 = vpop.permute.xlu0 %188
    %192 = vset.pattern.permute.xlu0 0
    %193 = vperm.xlu0 %192, %v155
    %v194 = vpop.permute.xlu0 %193
    %197 = vset.pattern.permute.xlu0 0
    %198 = vperm.xlu0 %197, %v156
    %v199 = vpop.permute.xlu0 %198
    %202 = vset.pattern.permute.xlu0 0
    %203 = vperm.xlu0 %202, %v157
    %v204 = vpop.permute.xlu0 %203
    %207 = vset.pattern.permute.xlu0 0
    %208 = vperm.xlu0 %207, %v158
    %v209 = vpop.permute.xlu0 %208
    %212 = vset.pattern.permute.xlu0 0
    %213 = vperm.xlu0 %212, %v159
    %v214 = vpop.permute.xlu0 %213
    %217 = vset.pattern.permute.xlu0 0
    %218 = vperm.xlu0 %217, %v160
    %v219 = vpop.permute.xlu0 %218
    %222 = vset.pattern.permute.xlu0 0
    %223 = vperm.xlu0 %222, %v161
    %v224 = vpop.permute.xlu0 %223
    %227 = vset.pattern.permute.xlu0 0
    %228 = vperm.xlu0 %227, %v162
    %v229 = vpop.permute.xlu0 %228
    %232 = vset.pattern.permute.xlu0 0
    %233 = vperm.xlu0 %232, %v163
    %v234 = vpop.permute.xlu0 %233
    %237 = vset.pattern.permute.xlu0 0
    %238 = vperm.xlu0 %237, %v164
    %v239 = vpop.permute.xlu0 %238
    %242 = vset.pattern.permute.xlu0 0
    %243 = vperm.xlu0 %242, %v165
    %v244 = vpop.permute.xlu0 %243
    %v246 = vmul.f32 %v119, %v169
    %v247 = vmul.f32 %v121, %v174
    %v248 = vmul.f32 %v123, %v179
    %v249 = vmul.f32 %v125, %v184
    %v250 = vmul.f32 %v127, %v189
    %v251 = vmul.f32 %v129, %v194
    %v252 = vmul.f32 %v131, %v199
    %v253 = vmul.f32 %v133, %v204
    %v254 = vmul.f32 %v135, %v209
    %v255 = vmul.f32 %v137, %v214
    %v256 = vmul.f32 %v139, %v219
    %v257 = vmul.f32 %v141, %v224
    %v258 = vmul.f32 %v143, %v229
    %v259 = vmul.f32 %v145, %v234
    %v260 = vmul.f32 %v147, %v239
    %v261 = vmul.f32 %v149, %v244
    %v262 = vpack.c.bf16 %v247, %v246
    %v263 = vpack.c.bf16 %v249, %v248
    %v264 = vpack.c.bf16 %v251, %v250
    %v265 = vpack.c.bf16 %v253, %v252
    %v266 = vpack.c.bf16 %v255, %v254
    %v267 = vpack.c.bf16 %v257, %v256
    %v268 = vpack.c.bf16 %v259, %v258
    %v269 = vpack.c.bf16 %v261, %v260
    %v270 = vld [vmem:[%s1] sm:$0x1]
    %s271 = scalar_lea.vmem [#allocation2], 1
    %v272 = vld [vmem:[%s271] ss:$2 sm:$0xff]
    %s273 = scalar_lea.vmem [#allocation2], 17
    %v274 = vld [vmem:[%s273] ss:$2 sm:$0xff]
    %s275 = scalar_lea.vmem [#allocation2], 33
    %v276 = vld [vmem:[%s275] ss:$2 sm:$0xff]
    %s277 = scalar_lea.vmem [#allocation2], 49
    %v278 = vld [vmem:[%s277] ss:$2 sm:$0xff]
    %s279 = scalar_lea.vmem [#allocation2], 65
    %v280 = vld [vmem:[%s279] ss:$2 sm:$0xff]
    %s281 = scalar_lea.vmem [#allocation2], 81
    %v282 = vld [vmem:[%s281] ss:$2 sm:$0xff]
    %s283 = scalar_lea.vmem [#allocation2], 97
    %v284 = vld [vmem:[%s283] ss:$2 sm:$0xff]
    %s285 = scalar_lea.vmem [#allocation2], 113
    %v286 = vld [vmem:[%s285] ss:$2 sm:$0xff]
    %s287 = scalar_lea.vmem [#allocation2], 129
    %v288 = vld [vmem:[%s287] ss:$2 sm:$0xff]
    %s289 = scalar_lea.vmem [#allocation2], 145
    %v290 = vld [vmem:[%s289] ss:$2 sm:$0xff]
    %s291 = scalar_lea.vmem [#allocation2], 161
    %v292 = vld [vmem:[%s291] ss:$2 sm:$0xff]
    %s293 = scalar_lea.vmem [#allocation2], 177
    %v294 = vld [vmem:[%s293] ss:$2 sm:$0xff]
    %s295 = scalar_lea.vmem [#allocation2], 193
    %v296 = vld [vmem:[%s295] ss:$2 sm:$0xff]
    %s297 = scalar_lea.vmem [#allocation2], 209
    %v298 = vld [vmem:[%s297] ss:$2 sm:$0xff]
    %s299 = scalar_lea.vmem [#allocation2], 225
    %v300 = vld [vmem:[%s299] ss:$2 sm:$0xff]
    %s301 = scalar_lea.vmem [#allocation2], 241
    %v302 = vld [vmem:[%s301] ss:$2 sm:$0xff]
    %v303 = vpack.c.bf16 %v274, %v272
    %v304 = vpack.c.bf16 %v278, %v276
    %v305 = vpack.c.bf16 %v282, %v280
    %v306 = vpack.c.bf16 %v286, %v284
    %v307 = vpack.c.bf16 %v290, %v288
    %v308 = vpack.c.bf16 %v294, %v292
    %v309 = vpack.c.bf16 %v298, %v296
    %v310 = vpack.c.bf16 %v302, %v300
    %s311 = scalar_lea.vmem %s1, 1
    %v312 = vld [vmem:[%s311] sm:$0x1]
    %v314 = vsel %vm86, %v303, 0
    %v317 = vsel %vm86, %v304, 0
    %v320 = vsel %vm86, %v305, 0
    %v323 = vsel %vm86, %v306, 0
    %v326 = vsel %vm86, %v307, 0
    %v329 = vsel %vm86, %v308, 0
    %v332 = vsel %vm86, %v309, 0
    %v335 = vsel %vm86, %v310, 0
    %vm337 = vcmask 1040384
    %v339 = vsel %vm337, %v312, 0
    %341 = vmatprep.subr.bf16.mxu0 0
    %342 = vmatpush1.bf16.msra.mxu0 %v339
    %343 = vmatprep.subr.bf16.mxu0 0
    %344 = vmatpush1.bf16.msra.mxu0 0
    %345 = vmatprep.subr.bf16.mxu0 0
    %346 = vmatpush1.bf16.msra.mxu0 0
    %347 = vmatprep.subr.bf16.mxu0 0
    %348 = vmatpush1.bf16.msra.mxu0 0
    %349 = vmatprep.subr.bf16.mxu0 0
    %350 = vmatpush1.bf16.msra.mxu0 0
    %351 = vmatprep.subr.bf16.mxu0 0
    %352 = vmatpush1.bf16.msra.mxu0 0
    %353 = vmatprep.subr.bf16.mxu0 0
    %354 = vmatpush1.bf16.msra.mxu0 0
    %355 = vmatprep.subr.bf16.mxu0 0
    %356 = vmatpush1.bf16.msra.mxu0 0
    %357 = vmatprep.subr.bf16.mxu0 0
    %358 = vmatpush1.bf16.msra.mxu0 0
    %359 = vmatprep.subr.bf16.mxu0 0
    %360 = vmatpush1.bf16.msra.mxu0 0
    %361 = vmatprep.subr.bf16.mxu0 0
    %362 = vmatpush1.bf16.msra.mxu0 0
    %363 = vmatprep.subr.bf16.mxu0 0
    %364 = vmatpush1.bf16.msra.mxu0 0
    %365 = vmatprep.subr.bf16.mxu0 0
    %366 = vmatpush1.bf16.msra.mxu0 0
    %367 = vmatprep.subr.bf16.mxu0 0
    %368 = vmatpush1.bf16.msra.mxu0 0
    %369 = vmatprep.subr.bf16.mxu0 0
    %370 = vmatpush1.bf16.msra.mxu0 0
    %371 = vmatprep.subr.bf16.mxu0 0
    %372 = vmatpush1.bf16.msra.mxu0 0
    %373 = vmatprep.mubr.bf16.mxu0 0
    %374 = vmatmul.mubr.bf16.gmra.mrb[0].mxu0 %v314
    %v375 = vpop.f32.mrb[0].mxu0
    %v376 = vadd.f32 0.0, %v375
    %v377 = vpop.f32.mrb[0].mxu0
    %v378 = vpop.f32.mrb[0].mxu0
    %v379 = vadd.f32 0.0, %v378
    %v380 = vpop.f32.mrb[0].mxu0
    %381 = vmatprep.mubr.bf16.mxu0 0
    %382 = vmatmul.mubr.bf16.gmra.mrb[0].mxu0 %v317
    %v383 = vpop.f32.mrb[0].mxu0
    %v384 = vadd.f32 0.0, %v383
    %v385 = vpop.f32.mrb[0].mxu0
    %v386 = vpop.f32.mrb[0].mxu0
    %v387 = vadd.f32 0.0, %v386
    %v388 = vpop.f32.mrb[0].mxu0
    %389 = vmatprep.mubr.bf16.mxu0 0
    %390 = vmatmul.mubr.bf16.gmra.mrb[0].mxu0 %v320
    %v391 = vpop.f32.mrb[0].mxu0
    %v392 = vadd.f32 0.0, %v391
    %v393 = vpop.f32.mrb[0].mxu0
    %v394 = vpop.f32.mrb[0].mxu0
    %v395 = vadd.f32 0.0, %v394
    %v396 = vpop.f32.mrb[0].mxu0
    %397 = vmatprep.mubr.bf16.mxu0 0
    %398 = vmatmul.mubr.bf16.gmra.mrb[0].mxu0 %v323
    %v399 = vpop.f32.mrb[0].mxu0
    %v400 = vadd.f32 0.0, %v399
    %v401 = vpop.f32.mrb[0].mxu0
    %v402 = vpop.f32.mrb[0].mxu0
    %v403 = vadd.f32 0.0, %v402
    %v404 = vpop.f32.mrb[0].mxu0
    %405 = vmatprep.mubr.bf16.mxu0 0
    %406 = vmatmul.mubr.bf16.gmra.mrb[0].mxu0 %v326
    %v407 = vpop.f32.mrb[0].mxu0
    %v408 = vadd.f32 0.0, %v407
    %v409 = vpop.f32.mrb[0].mxu0
    %v410 = vpop.f32.mrb[0].mxu0
    %v411 = vadd.f32 0.0, %v410
    %v412 = vpop.f32.mrb[0].mxu0
    %413 = vmatprep.mubr.bf16.mxu0 0
    %414 = vmatmul.mubr.bf16.gmra.mrb[0].mxu0 %v329
    %v415 = vpop.f32.mrb[0].mxu0
    %v416 = vadd.f32 0.0, %v415
    %v417 = vpop.f32.mrb[0].mxu0
    %v418 = vpop.f32.mrb[0].mxu0
    %v419 = vadd.f32 0.0, %v418
    %v420 = vpop.f32.mrb[0].mxu0
    %421 = vmatprep.mubr.bf16.mxu0 0
    %422 = vmatmul.mubr.bf16.gmra.mrb[0].mxu0 %v332
    %v423 = vpop.f32.mrb[0].mxu0
    %v424 = vadd.f32 0.0, %v423
    %v425 = vpop.f32.mrb[0].mxu0
    %v426 = vpop.f32.mrb[0].mxu0
    %v427 = vadd.f32 0.0, %v426
    %v428 = vpop.f32.mrb[0].mxu0
    %429 = vmatprep.mubr.bf16.mxu0 0
    %430 = vmatmul.mubr.bf16.gmra.mrb[0].mxu0 %v335
    %v431 = vpop.f32.mrb[0].mxu0
    %v432 = vadd.f32 0.0, %v431
    %v433 = vpop.f32.mrb[0].mxu0
    %v434 = vpop.f32.mrb[0].mxu0
    %v435 = vadd.f32 0.0, %v434
    %v436 = vpop.f32.mrb[0].mxu0
    %437 = vdwg.mxu0
    %v439 = vsel %vm86, %v262, 0
    %v442 = vsel %vm86, %v263, 0
    %v445 = vsel %vm86, %v264, 0
    %v448 = vsel %vm86, %v265, 0
    %v451 = vsel %vm86, %v266, 0
    %v454 = vsel %vm86, %v267, 0
    %v457 = vsel %vm86, %v268, 0
    %v460 = vsel %vm86, %v269, 0
    %v463 = vsel %vm337, %v270, 0
    %465 = vmatprep.subr.bf16.mxu0 0
    %466 = vmatpush1.bf16.msra.mxu0 %v463
    %467 = vmatprep.subr.bf16.mxu0 0
    %468 = vmatpush1.bf16.msra.mxu0 0
    %469 = vmatprep.subr.bf16.mxu0 0
    %470 = vmatpush1.bf16.msra.mxu0 0
    %471 = vmatprep.subr.bf16.mxu0 0
    %472 = vmatpush1.bf16.msra.mxu0 0
    %473 = vmatprep.subr.bf16.mxu0 0
    %474 = vmatpush1.bf16.msra.mxu0 0
    %475 = vmatprep.subr.bf16.mxu0 0
    %476 = vmatpush1.bf16.msra.mxu0 0
    %477 = vmatprep.subr.bf16.mxu0 0
    %478 = vmatpush1.bf16.msra.mxu0 0
    %479 = vmatprep.subr.bf16.mxu0 0
    %480 = vmatpush1.bf16.msra.mxu0 0
    %481 = vmatprep.subr.bf16.mxu0 0
    %482 = vmatpush1.bf16.msra.mxu0 0
    %483 = vmatprep.subr.bf16.mxu0 0
    %484 = vmatpush1.bf16.msra.mxu0 0
    %485 = vmatprep.subr.bf16.mxu0 0
    %486 = vmatpush1.bf16.msra.mxu0 0
    %487 = vmatprep.subr.bf16.mxu0 0
    %488 = vmatpush1.bf16.msra.mxu0 0
    %489 = vmatprep.subr.bf16.mxu0 0
    %490 = vmatpush1.bf16.msra.mxu0 0
    %491 = vmatprep.subr.bf16.mxu0 0
    %492 = vmatpush1.bf16.msra.mxu0 0
    %493 = vmatprep.subr.bf16.mxu0 0
    %494 = vmatpush1.bf16.msra.mxu0 0
    %495 = vmatprep.subr.bf16.mxu0 0
    %496 = vmatpush1.bf16.msra.mxu0 0
    %497 = vmatprep.mubr.bf16.mxu0 0
    %498 = vmatmul.mubr.bf16.gmra.mrb[0].mxu0 %v439
    %v499 = vpop.f32.mrb[0].mxu0
    %v500 = vadd.f32 %v376, %v499
    %v501 = vpop.f32.mrb[0].mxu0
    %v502 = vpop.f32.mrb[0].mxu0
    %v503 = vadd.f32 %v379, %v502
    %v504 = vpop.f32.mrb[0].mxu0
    %505 = vmatprep.mubr.bf16.mxu0 0
    %506 = vmatmul.mubr.bf16.gmra.mrb[0].mxu0 %v442
    %v507 = vpop.f32.mrb[0].mxu0
    %v508 = vadd.f32 %v384, %v507
    %v509 = vpop.f32.mrb[0].mxu0
    %v510 = vpop.f32.mrb[0].mxu0
    %v511 = vadd.f32 %v387, %v510
    %v512 = vpop.f32.mrb[0].mxu0
    %513 = vmatprep.mubr.bf16.mxu0 0
    %514 = vmatmul.mubr.bf16.gmra.mrb[0].mxu0 %v445
    %v515 = vpop.f32.mrb[0].mxu0
    %v516 = vadd.f32 %v392, %v515
    %v517 = vpop.f32.mrb[0].mxu0
    %v518 = vpop.f32.mrb[0].mxu0
    %v519 = vadd.f32 %v395, %v518
    %v520 = vpop.f32.mrb[0].mxu0
    %521 = vmatprep.mubr.bf16.mxu0 0
    %522 = vmatmul.mubr.bf16.gmra.mrb[0].mxu0 %v448
    %v523 = vpop.f32.mrb[0].mxu0
    %v524 = vadd.f32 %v400, %v523
    %v525 = vpop.f32.mrb[0].mxu0
    %v526 = vpop.f32.mrb[0].mxu0
    %v527 = vadd.f32 %v403, %v526
    %v528 = vpop.f32.mrb[0].mxu0
    %529 = vmatprep.mubr.bf16.mxu0 0
    %530 = vmatmul.mubr.bf16.gmra.mrb[0].mxu0 %v451
    %v531 = vpop.f32.mrb[0].mxu0
    %v532 = vadd.f32 %v408, %v531
    %v533 = vpop.f32.mrb[0].mxu0
    %v534 = vpop.f32.mrb[0].mxu0
    %v535 = vadd.f32 %v411, %v534
    %v536 = vpop.f32.mrb[0].mxu0
    %537 = vmatprep.mubr.bf16.mxu0 0
    %538 = vmatmul.mubr.bf16.gmra.mrb[0].mxu0 %v454
    %v539 = vpop.f32.mrb[0].mxu0
    %v540 = vadd.f32 %v416, %v539
    %v541 = vpop.f32.mrb[0].mxu0
    %v542 = vpop.f32.mrb[0].mxu0
    %v543 = vadd.f32 %v419, %v542
    %v544 = vpop.f32.mrb[0].mxu0
    %545 = vmatprep.mubr.bf16.mxu0 0
    %546 = vmatmul.mubr.bf16.gmra.mrb[0].mxu0 %v457
    %v547 = vpop.f32.mrb[0].mxu0
    %v548 = vadd.f32 %v424, %v547
    %v549 = vpop.f32.mrb[0].mxu0
    %v550 = vpop.f32.mrb[0].mxu0
    %v551 = vadd.f32 %v427, %v550
    %v552 = vpop.f32.mrb[0].mxu0
    %553 = vmatprep.mubr.bf16.mxu0 0
    %554 = vmatmul.mubr.bf16.gmra.mrb[0].mxu0 %v460
    %v555 = vpop.f32.mrb[0].mxu0
    %v556 = vadd.f32 %v432, %v555
    %v557 = vpop.f32.mrb[0].mxu0
    %v558 = vpop.f32.mrb[0].mxu0
    %v559 = vadd.f32 %v435, %v558
    %v560 = vpop.f32.mrb[0].mxu0
    %561 = vdwg.mxu0
    %s562 = scalar_lea.vmem [#allocation2], 2
    %v563 = vld [vmem:[%s562] ss:$2 sm:$0xff]
    %s564 = scalar_lea.vmem [#allocation2], 18
    %v565 = vld [vmem:[%s564] ss:$2 sm:$0xff]
    %s566 = scalar_lea.vmem [#allocation2], 34
    %v567 = vld [vmem:[%s566] ss:$2 sm:$0xff]
    %s568 = scalar_lea.vmem [#allocation2], 50
    %v569 = vld [vmem:[%s568] ss:$2 sm:$0xff]
    %s570 = scalar_lea.vmem [#allocation2], 66
    %v571 = vld [vmem:[%s570] ss:$2 sm:$0xff]
    %s572 = scalar_lea.vmem [#allocation2], 82
    %v573 = vld [vmem:[%s572] ss:$2 sm:$0xff]
    %s574 = scalar_lea.vmem [#allocation2], 98
    %v575 = vld [vmem:[%s574] ss:$2 sm:$0xff]
    %s576 = scalar_lea.vmem [#allocation2], 114
    %v577 = vld [vmem:[%s576] ss:$2 sm:$0xff]
    %s578 = scalar_lea.vmem [#allocation2], 130
    %v579 = vld [vmem:[%s578] ss:$2 sm:$0xff]
    %s580 = scalar_lea.vmem [#allocation2], 146
    %v581 = vld [vmem:[%s580] ss:$2 sm:$0xff]
    %s582 = scalar_lea.vmem [#allocation2], 162
    %v583 = vld [vmem:[%s582] ss:$2 sm:$0xff]
    %s584 = scalar_lea.vmem [#allocation2], 178
    %v585 = vld [vmem:[%s584] ss:$2 sm:$0xff]
    %s586 = scalar_lea.vmem [#allocation2], 194
    %v587 = vld [vmem:[%s586] ss:$2 sm:$0xff]
    %s588 = scalar_lea.vmem [#allocation2], 210
    %v589 = vld [vmem:[%s588] ss:$2 sm:$0xff]
    %s590 = scalar_lea.vmem [#allocation2], 226
    %v591 = vld [vmem:[%s590] ss:$2 sm:$0xff]
    %s592 = scalar_lea.vmem [#allocation2], 242
    %v593 = vld [vmem:[%s592] ss:$2 sm:$0xff]
    %v594 = vpack.c.bf16 %v565, %v563
    %v595 = vpack.c.bf16 %v569, %v567
    %v596 = vpack.c.bf16 %v573, %v571
    %v597 = vpack.c.bf16 %v577, %v575
    %v598 = vpack.c.bf16 %v581, %v579
    %v599 = vpack.c.bf16 %v585, %v583
    %v600 = vpack.c.bf16 %v589, %v587
    %v601 = vpack.c.bf16 %v593, %v591
    %s602 = scalar_lea.vmem %s1, 2
    %v603 = vld [vmem:[%s602] sm:$0x1]
    %v605 = vsel %vm86, %v594, 0
    %v608 = vsel %vm86, %v595, 0
    %v611 = vsel %vm86, %v596, 0
    %v614 = vsel %vm86, %v597, 0
    %v617 = vsel %vm86, %v598, 0
    %v620 = vsel %vm86, %v599, 0
    %v623 = vsel %vm86, %v600, 0
    %v626 = vsel %vm86, %v601, 0
    %v629 = vsel %vm337, %v603, 0
    %631 = vmatprep.subr.bf16.mxu0 0
    %632 = vmatpush1.bf16.msra.mxu0 %v629
    %633 = vmatprep.subr.bf16.mxu0 0
    %634 = vmatpush1.bf16.msra.mxu0 0
    %635 = vmatprep.subr.bf16.mxu0 0
    %636 = vmatpush1.bf16.msra.mxu0 0
    %637 = vmatprep.subr.bf16.mxu0 0
    %638 = vmatpush1.bf16.msra.mxu0 0
    %639 = vmatprep.subr.bf16.mxu0 0
    %640 = vmatpush1.bf16.msra.mxu0 0
    %641 = vmatprep.subr.bf16.mxu0 0
    %642 = vmatpush1.bf16.msra.mxu0 0
    %643 = vmatprep.subr.bf16.mxu0 0
    %644 = vmatpush1.bf16.msra.mxu0 0
    %645 = vmatprep.subr.bf16.mxu0 0
    %646 = vmatpush1.bf16.msra.mxu0 0
    %647 = vmatprep.subr.bf16.mxu0 0
    %648 = vmatpush1.bf16.msra.mxu0 0
    %649 = vmatprep.subr.bf16.mxu0 0
    %650 = vmatpush1.bf16.msra.mxu0 0
    %651 = vmatprep.subr.bf16.mxu0 0
    %652 = vmatpush1.bf16.msra.mxu0 0
    %653 = vmatprep.subr.bf16.mxu0 0
    %654 = vmatpush1.bf16.msra.mxu0 0
    %655 = vmatprep.subr.bf16.mxu0 0
    %656 = vmatpush1.bf16.msra.mxu0 0
    %657 = vmatprep.subr.bf16.mxu0 0
    %658 = vmatpush1.bf16.msra.mxu0 0
    %659 = vmatprep.subr.bf16.mxu0 0
    %660 = vmatpush1.bf16.msra.mxu0 0
    %661 = vmatprep.subr.bf16.mxu0 0
    %662 = vmatpush1.bf16.msra.mxu0 0
    %663 = vmatprep.mubr.bf16.mxu0 0
    %664 = vmatmul.mubr.bf16.gmra.mrb[0].mxu0 %v605
    %v665 = vpop.f32.mrb[0].mxu0
    %v666 = vadd.f32 0.0, %v665
    %v667 = vpop.f32.mrb[0].mxu0
    %v668 = vpop.f32.mrb[0].mxu0
    %v669 = vadd.f32 0.0, %v668
    %v670 = vpop.f32.mrb[0].mxu0
    %671 = vmatprep.mubr.bf16.mxu0 0
    %672 = vmatmul.mubr.bf16.gmra.mrb[0].mxu0 %v608
    %v673 = vpop.f32.mrb[0].mxu0
    %v674 = vadd.f32 0.0, %v673
    %v675 = vpop.f32.mrb[0].mxu0
    %v676 = vpop.f32.mrb[0].mxu0
    %v677 = vadd.f32 0.0, %v676
    %v678 = vpop.f32.mrb[0].mxu0
    %679 = vmatprep.mubr.bf16.mxu0 0
    %680 = vmatmul.mubr.bf16.gmra.mrb[0].mxu0 %v611
    %v681 = vpop.f32.mrb[0].mxu0
    %v682 = vadd.f32 0.0, %v681
    %v683 = vpop.f32.mrb[0].mxu0
    %v684 = vpop.f32.mrb[0].mxu0
    %v685 = vadd.f32 0.0, %v684
    %v686 = vpop.f32.mrb[0].mxu0
    %687 = vmatprep.mubr.bf16.mxu0 0
    %688 = vmatmul.mubr.bf16.gmra.mrb[0].mxu0 %v614
    %v689 = vpop.f32.mrb[0].mxu0
    %v690 = vadd.f32 0.0, %v689
    %v691 = vpop.f32.mrb[0].mxu0
    %v692 = vpop.f32.mrb[0].mxu0
    %v693 = vadd.f32 0.0, %v692
    %v694 = vpop.f32.mrb[0].mxu0
    %695 = vmatprep.mubr.bf16.mxu0 0
    %696 = vmatmul.mubr.bf16.gmra.mrb[0].mxu0 %v617
    %v697 = vpop.f32.mrb[0].mxu0
    %v698 = vadd.f32 0.0, %v697
    %v699 = vpop.f32.mrb[0].mxu0
    %v700 = vpop.f32.mrb[0].mxu0
    %v701 = vadd.f32 0.0, %v700
    %v702 = vpop.f32.mrb[0].mxu0
    %703 = vmatprep.mubr.bf16.mxu0 0
    %704 = vmatmul.mubr.bf16.gmra.mrb[0].mxu0 %v620
    %v705 = vpop.f32.mrb[0].mxu0
    %v706 = vadd.f32 0.0, %v705
    %v707 = vpop.f32.mrb[0].mxu0
    %v708 = vpop.f32.mrb[0].mxu0
    %v709 = vadd.f32 0.0, %v708
    %v710 = vpop.f32.mrb[0].mxu0
    %711 = vmatprep.mubr.bf16.mxu0 0
    %712 = vmatmul.mubr.bf16.gmra.mrb[0].mxu0 %v623
    %v713 = vpop.f32.mrb[0].mxu0
    %v714 = vadd.f32 0.0, %v713
    %v715 = vpop.f32.mrb[0].mxu0
    %v716 = vpop.f32.mrb[0].mxu0
    %v717 = vadd.f32 0.0, %v716
    %v718 = vpop.f32.mrb[0].mxu0
    %719 = vmatprep.mubr.bf16.mxu0 0
    %720 = vmatmul.mubr.bf16.gmra.mrb[0].mxu0 %v626
    %v721 = vpop.f32.mrb[0].mxu0
    %v722 = vadd.f32 0.0, %v721
    %v723 = vpop.f32.mrb[0].mxu0
    %v724 = vpop.f32.mrb[0].mxu0
    %v725 = vadd.f32 0.0, %v724
    %v726 = vpop.f32.mrb[0].mxu0
    %727 = vdwg.mxu0
    %v728 = vadd.f32 %v500, %v666
    %v729 = vadd.f32 %v503, %v669
    %v730 = vadd.f32 %v508, %v674
    %v731 = vadd.f32 %v511, %v677
    %v732 = vadd.f32 %v516, %v682
    %v733 = vadd.f32 %v519, %v685
    %v734 = vadd.f32 %v524, %v690
    %v735 = vadd.f32 %v527, %v693
    %v736 = vadd.f32 %v532, %v698
    %v737 = vadd.f32 %v535, %v701
    %v738 = vadd.f32 %v540, %v706
    %v739 = vadd.f32 %v543, %v709
    %v740 = vadd.f32 %v548, %v714
    %v741 = vadd.f32 %v551, %v717
    %v742 = vadd.f32 %v556, %v722
    %v743 = vadd.f32 %v559, %v725
    %s744 = scalar_lea.vmem [#allocation2], 3
    %v745 = vld [vmem:[%s744] ss:$2 sm:$0xff]
    %s746 = scalar_lea.vmem [#allocation2], 19
    %v747 = vld [vmem:[%s746] ss:$2 sm:$0xff]
    %s748 = scalar_lea.vmem [#allocation2], 35
    %v749 = vld [vmem:[%s748] ss:$2 sm:$0xff]
    %s750 = scalar_lea.vmem [#allocation2], 51
    %v751 = vld [vmem:[%s750] ss:$2 sm:$0xff]
    %s752 = scalar_lea.vmem [#allocation2], 67
    %v753 = vld [vmem:[%s752] ss:$2 sm:$0xff]
    %s754 = scalar_lea.vmem [#allocation2], 83
    %v755 = vld [vmem:[%s754] ss:$2 sm:$0xff]
    %s756 = scalar_lea.vmem [#allocation2], 99
    %v757 = vld [vmem:[%s756] ss:$2 sm:$0xff]
    %s758 = scalar_lea.vmem [#allocation2], 115
    %v759 = vld [vmem:[%s758] ss:$2 sm:$0xff]
    %s760 = scalar_lea.vmem [#allocation2], 131
    %v761 = vld [vmem:[%s760] ss:$2 sm:$0xff]
    %s762 = scalar_lea.vmem [#allocation2], 147
    %v763 = vld [vmem:[%s762] ss:$2 sm:$0xff]
    %s764 = scalar_lea.vmem [#allocation2], 163
    %v765 = vld [vmem:[%s764] ss:$2 sm:$0xff]
    %s766 = scalar_lea.vmem [#allocation2], 179
    %v767 = vld [vmem:[%s766] ss:$2 sm:$0xff]
    %s768 = scalar_lea.vmem [#allocation2], 195
    %v769 = vld [vmem:[%s768] ss:$2 sm:$0xff]
    %s770 = scalar_lea.vmem [#allocation2], 211
    %v771 = vld [vmem:[%s770] ss:$2 sm:$0xff]
    %s772 = scalar_lea.vmem [#allocation2], 227
    %v773 = vld [vmem:[%s772] ss:$2 sm:$0xff]
    %s774 = scalar_lea.vmem [#allocation2], 243
    %v775 = vld [vmem:[%s774] ss:$2 sm:$0xff]
    %v776 = vld [vmem:[%s5] sm:$0xff]
    %v777 = vld [vmem:[%s5 + $0x8] sm:$0xff]
    %v778 = vld [vmem:[%s5 + $0x10] sm:$0xff]
    %v779 = vld [vmem:[%s5 + $0x18] sm:$0xff]
    %v780 = vld [vmem:[%s5 + $0x20] sm:$0xff]
    %v781 = vld [vmem:[%s5 + $0x28] sm:$0xff]
    %v782 = vld [vmem:[%s5 + $0x30] sm:$0xff]
    %v783 = vld [vmem:[%s5 + $0x38] sm:$0xff]
    %v784 = vld [vmem:[%s5 + $0x40] sm:$0xff]
    %v785 = vld [vmem:[%s5 + $0x48] sm:$0xff]
    %v786 = vld [vmem:[%s5 + $0x50] sm:$0xff]
    %v787 = vld [vmem:[%s5 + $0x58] sm:$0xff]
    %v788 = vld [vmem:[%s5 + $0x60] sm:$0xff]
    %v789 = vld [vmem:[%s5 + $0x68] sm:$0xff]
    %v790 = vld [vmem:[%s5 + $0x70] sm:$0xff]
    %v791 = vld [vmem:[%s5 + $0x78] sm:$0xff]
    %793 = vset.pattern.permute.xlu0 0
    %794 = vperm.xlu0 %793, %v776
    %v795 = vpop.permute.xlu0 %794
    %798 = vset.pattern.permute.xlu0 0
    %799 = vperm.xlu0 %798, %v777
    %v800 = vpop.permute.xlu0 %799
    %803 = vset.pattern.permute.xlu0 0
    %804 = vperm.xlu0 %803, %v778
    %v805 = vpop.permute.xlu0 %804
    %808 = vset.pattern.permute.xlu0 0
    %809 = vperm.xlu0 %808, %v779
    %v810 = vpop.permute.xlu0 %809
    %813 = vset.pattern.permute.xlu0 0
    %814 = vperm.xlu0 %813, %v780
    %v815 = vpop.permute.xlu0 %814
    %818 = vset.pattern.permute.xlu0 0
    %819 = vperm.xlu0 %818, %v781
    %v820 = vpop.permute.xlu0 %819
    %823 = vset.pattern.permute.xlu0 0
    %824 = vperm.xlu0 %823, %v782
    %v825 = vpop.permute.xlu0 %824
    %828 = vset.pattern.permute.xlu0 0
    %829 = vperm.xlu0 %828, %v783
    %v830 = vpop.permute.xlu0 %829
    %833 = vset.pattern.permute.xlu0 0
    %834 = vperm.xlu0 %833, %v784
    %v835 = vpop.permute.xlu0 %834
    %838 = vset.pattern.permute.xlu0 0
    %839 = vperm.xlu0 %838, %v785
    %v840 = vpop.permute.xlu0 %839
    %843 = vset.pattern.permute.xlu0 0
    %844 = vperm.xlu0 %843, %v786
    %v845 = vpop.permute.xlu0 %844
    %848 = vset.pattern.permute.xlu0 0
    %849 = vperm.xlu0 %848, %v787
    %v850 = vpop.permute.xlu0 %849
    %853 = vset.pattern.permute.xlu0 0
    %854 = vperm.xlu0 %853, %v788
    %v855 = vpop.permute.xlu0 %854
    %858 = vset.pattern.permute.xlu0 0
    %859 = vperm.xlu0 %858, %v789
    %v860 = vpop.permute.xlu0 %859
    %863 = vset.pattern.permute.xlu0 0
    %864 = vperm.xlu0 %863, %v790
    %v865 = vpop.permute.xlu0 %864
    %868 = vset.pattern.permute.xlu0 0
    %869 = vperm.xlu0 %868, %v791
    %v870 = vpop.permute.xlu0 %869
    %v872 = vmul.f32 %v745, %v795
    %v873 = vmul.f32 %v747, %v800
    %v874 = vmul.f32 %v749, %v805
    %v875 = vmul.f32 %v751, %v810
    %v876 = vmul.f32 %v753, %v815
    %v877 = vmul.f32 %v755, %v820
    %v878 = vmul.f32 %v757, %v825
    %v879 = vmul.f32 %v759, %v830
    %v880 = vmul.f32 %v761, %v835
    %v881 = vmul.f32 %v763, %v840
    %v882 = vmul.f32 %v765, %v845
    %v883 = vmul.f32 %v767, %v850
    %v884 = vmul.f32 %v769, %v855
    %v885 = vmul.f32 %v771, %v860
    %v886 = vmul.f32 %v773, %v865
    %v887 = vmul.f32 %v775, %v870
    %v888 = vpack.c.bf16 %v873, %v872
    %v889 = vpack.c.bf16 %v875, %v874
    %v890 = vpack.c.bf16 %v877, %v876
    %v891 = vpack.c.bf16 %v879, %v878
    %v892 = vpack.c.bf16 %v881, %v880
    %v893 = vpack.c.bf16 %v883, %v882
    %v894 = vpack.c.bf16 %v885, %v884
    %v895 = vpack.c.bf16 %v887, %v886
    %s896 = scalar_lea.vmem %s1, 3
    %v897 = vld [vmem:[%s896] sm:$0x1]
    %v899 = vsel %vm86, %v888, 0
    %v902 = vsel %vm86, %v889, 0
    %v905 = vsel %vm86, %v890, 0
    %v908 = vsel %vm86, %v891, 0
    %v911 = vsel %vm86, %v892, 0
    %v914 = vsel %vm86, %v893, 0
    %v917 = vsel %vm86, %v894, 0
    %v920 = vsel %vm86, %v895, 0
    %v923 = vsel %vm337, %v897, 0
    %925 = vmatprep.subr.bf16.mxu0 0
    %926 = vmatpush1.bf16.msra.mxu0 %v923
    %927 = vmatprep.subr.bf16.mxu0 0
    %928 = vmatpush1.bf16.msra.mxu0 0
    %929 = vmatprep.subr.bf16.mxu0 0
    %930 = vmatpush1.bf16.msra.mxu0 0
    %931 = vmatprep.subr.bf16.mxu0 0
    %932 = vmatpush1.bf16.msra.mxu0 0
    %933 = vmatprep.subr.bf16.mxu0 0
    %934 = vmatpush1.bf16.msra.mxu0 0
    %935 = vmatprep.subr.bf16.mxu0 0
    %936 = vmatpush1.bf16.msra.mxu0 0
    %937 = vmatprep.subr.bf16.mxu0 0
    %938 = vmatpush1.bf16.msra.mxu0 0
    %939 = vmatprep.subr.bf16.mxu0 0
    %940 = vmatpush1.bf16.msra.mxu0 0
    %941 = vmatprep.subr.bf16.mxu0 0
    %942 = vmatpush1.bf16.msra.mxu0 0
    %943 = vmatprep.subr.bf16.mxu0 0
    %944 = vmatpush1.bf16.msra.mxu0 0
    %945 = vmatprep.subr.bf16.mxu0 0
    %946 = vmatpush1.bf16.msra.mxu0 0
    %947 = vmatprep.subr.bf16.mxu0 0
    %948 = vmatpush1.bf16.msra.mxu0 0
    %949 = vmatprep.subr.bf16.mxu0 0
    %950 = vmatpush1.bf16.msra.mxu0 0
    %951 = vmatprep.subr.bf16.mxu0 0
    %952 = vmatpush1.bf16.msra.mxu0 0
    %953 = vmatprep.subr.bf16.mxu0 0
    %954 = vmatpush1.bf16.msra.mxu0 0
    %955 = vmatprep.subr.bf16.mxu0 0
    %956 = vmatpush1.bf16.msra.mxu0 0
    %957 = vmatprep.mubr.bf16.mxu0 0
    %958 = vmatmul.mubr.bf16.gmra.mrb[0].mxu0 %v899
    %v959 = vpop.f32.mrb[0].mxu0
    %v960 = vadd.f32 0.0, %v959
    %v961 = vpop.f32.mrb[0].mxu0
    %v962 = vpop.f32.mrb[0].mxu0
    %v963 = vadd.f32 0.0, %v962
    %v964 = vpop.f32.mrb[0].mxu0
    %965 = vmatprep.mubr.bf16.mxu0 0
    %966 = vmatmul.mubr.bf16.gmra.mrb[0].mxu0 %v902
    %v967 = vpop.f32.mrb[0].mxu0
    %v968 = vadd.f32 0.0, %v967
    %v969 = vpop.f32.mrb[0].mxu0
    %v970 = vpop.f32.mrb[0].mxu0
    %v971 = vadd.f32 0.0, %v970
    %v972 = vpop.f32.mrb[0].mxu0
    %973 = vmatprep.mubr.bf16.mxu0 0
    %974 = vmatmul.mubr.bf16.gmra.mrb[0].mxu0 %v905
    %v975 = vpop.f32.mrb[0].mxu0
    %v976 = vadd.f32 0.0, %v975
    %v977 = vpop.f32.mrb[0].mxu0
    %v978 = vpop.f32.mrb[0].mxu0
    %v979 = vadd.f32 0.0, %v978
    %v980 = vpop.f32.mrb[0].mxu0
    %981 = vmatprep.mubr.bf16.mxu0 0
    %982 = vmatmul.mubr.bf16.gmra.mrb[0].mxu0 %v908
    %v983 = vpop.f32.mrb[0].mxu0
    %v984 = vadd.f32 0.0, %v983
    %v985 = vpop.f32.mrb[0].mxu0
    %v986 = vpop.f32.mrb[0].mxu0
    %v987 = vadd.f32 0.0, %v986
    %v988 = vpop.f32.mrb[0].mxu0
    %989 = vmatprep.mubr.bf16.mxu0 0
    %990 = vmatmul.mubr.bf16.gmra.mrb[0].mxu0 %v911
    %v991 = vpop.f32.mrb[0].mxu0
    %v992 = vadd.f32 0.0, %v991
    %v993 = vpop.f32.mrb[0].mxu0
    %v994 = vpop.f32.mrb[0].mxu0
    %v995 = vadd.f32 0.0, %v994
    %v996 = vpop.f32.mrb[0].mxu0
    %997 = vmatprep.mubr.bf16.mxu0 0
    %998 = vmatmul.mubr.bf16.gmra.mrb[0].mxu0 %v914
    %v999 = vpop.f32.mrb[0].mxu0
    %v1000 = vadd.f32 0.0, %v999
    %v1001 = vpop.f32.mrb[0].mxu0
    %v1002 = vpop.f32.mrb[0].mxu0
    %v1003 = vadd.f32 0.0, %v1002
    %v1004 = vpop.f32.mrb[0].mxu0
    %1005 = vmatprep.mubr.bf16.mxu0 0
    %1006 = vmatmul.mubr.bf16.gmra.mrb[0].mxu0 %v917
    %v1007 = vpop.f32.mrb[0].mxu0
    %v1008 = vadd.f32 0.0, %v1007
    %v1009 = vpop.f32.mrb[0].mxu0
    %v1010 = vpop.f32.mrb[0].mxu0
    %v1011 = vadd.f32 0.0, %v1010
    %v1012 = vpop.f32.mrb[0].mxu0
    %1013 = vmatprep.mubr.bf16.mxu0 0
    %1014 = vmatmul.mubr.bf16.gmra.mrb[0].mxu0 %v920
    %v1015 = vpop.f32.mrb[0].mxu0
    %v1016 = vadd.f32 0.0, %v1015
    %v1017 = vpop.f32.mrb[0].mxu0
    %v1018 = vpop.f32.mrb[0].mxu0
    %v1019 = vadd.f32 0.0, %v1018
    %v1020 = vpop.f32.mrb[0].mxu0
    %1021 = vdwg.mxu0
    %v1022 = vadd.f32 %v728, %v960
    %v1023 = vadd.f32 %v729, %v963
    %v1024 = vadd.f32 %v730, %v968
    %v1025 = vadd.f32 %v731, %v971
    %v1026 = vadd.f32 %v732, %v976
    %v1027 = vadd.f32 %v733, %v979
    %v1028 = vadd.f32 %v734, %v984
    %v1029 = vadd.f32 %v735, %v987
    %v1030 = vadd.f32 %v736, %v992
    %v1031 = vadd.f32 %v737, %v995
    %v1032 = vadd.f32 %v738, %v1000
    %v1033 = vadd.f32 %v739, %v1003
    %v1034 = vadd.f32 %v740, %v1008
    %v1035 = vadd.f32 %v741, %v1011
    %v1036 = vadd.f32 %v742, %v1016
    %v1037 = vadd.f32 %v743, %v1019
    %vm1038 = vcmask 64512
    %v1039 = vsel %vm1038, %v1022, 0.0
    %v1040 = vsel %vm1038, %v1023, 0.0
    %v1041 = vadd.f32 %v1039, %v1040
    %v1042 = vsel %vm1038, %v1024, 0.0
    %v1043 = vadd.f32 %v1041, %v1042
    %v1044 = vsel %vm1038, %v1025, 0.0
    %v1045 = vadd.f32 %v1043, %v1044
    %v1046 = vsel %vm1038, %v1026, 0.0
    %v1047 = vadd.f32 %v1045, %v1046
    %v1048 = vsel %vm1038, %v1027, 0.0
    %v1049 = vadd.f32 %v1047, %v1048
    %v1050 = vsel %vm1038, %v1028, 0.0
    %v1051 = vadd.f32 %v1049, %v1050
    %v1052 = vsel %vm1038, %v1029, 0.0
    %v1053 = vadd.f32 %v1051, %v1052
    %v1054 = vsel %vm1038, %v1030, 0.0
    %v1055 = vadd.f32 %v1053, %v1054
    %v1056 = vsel %vm1038, %v1031, 0.0
    %v1057 = vadd.f32 %v1055, %v1056
    %v1058 = vsel %vm1038, %v1032, 0.0
    %v1059 = vadd.f32 %v1057, %v1058
    %v1060 = vsel %vm1038, %v1033, 0.0
    %v1061 = vadd.f32 %v1059, %v1060
    %v1062 = vsel %vm1038, %v1034, 0.0
    %v1063 = vadd.f32 %v1061, %v1062
    %v1064 = vsel %vm1038, %v1035, 0.0
    %v1065 = vadd.f32 %v1063, %v1064
    %v1066 = vsel %vm1038, %v1036, 0.0
    %v1067 = vadd.f32 %v1065, %v1066
    %v1068 = vsel %vm1038, %v1037, 0.0
    %v1069 = vadd.f32 %v1067, %v1068
    %v1070 = vrot.slane %v1069, 4
    %v1071 = vadd.f32 %v1069, %v1070
    %v1072 = vrot.slane %v1071, 2
    %v1073 = vadd.f32 %v1071, %v1072
    %v1074 = vrot.slane %v1073, 1
    %v1075 = vadd.f32 %v1073, %v1074
    %v1076 = vmul.f32 %v1075, 0.0078125
    %v1077 = vsub.f32 %v1022, %v1076
    %v1078 = vsub.f32 %v1023, %v1076
    %v1079 = vsub.f32 %v1024, %v1076
    %v1080 = vsub.f32 %v1025, %v1076
    %v1081 = vsub.f32 %v1026, %v1076
    %v1082 = vsub.f32 %v1027, %v1076
    %v1083 = vsub.f32 %v1028, %v1076
    %v1084 = vsub.f32 %v1029, %v1076
    %v1085 = vsub.f32 %v1030, %v1076
    %v1086 = vsub.f32 %v1031, %v1076
    %v1087 = vsub.f32 %v1032, %v1076
    %v1088 = vsub.f32 %v1033, %v1076
    %v1089 = vsub.f32 %v1034, %v1076
    %v1090 = vsub.f32 %v1035, %v1076
    %v1091 = vsub.f32 %v1036, %v1076
    %v1092 = vsub.f32 %v1037, %v1076
    %v1093 = vmul.f32 %v1077, %v1077
    %v1094 = vmul.f32 %v1078, %v1078
    %v1095 = vmul.f32 %v1079, %v1079
    %v1096 = vmul.f32 %v1080, %v1080
    %v1097 = vmul.f32 %v1081, %v1081
    %v1098 = vmul.f32 %v1082, %v1082
    %v1099 = vmul.f32 %v1083, %v1083
    %v1100 = vmul.f32 %v1084, %v1084
    %v1101 = vmul.f32 %v1085, %v1085
    %v1102 = vmul.f32 %v1086, %v1086
    %v1103 = vmul.f32 %v1087, %v1087
    %v1104 = vmul.f32 %v1088, %v1088
    %v1105 = vmul.f32 %v1089, %v1089
    %v1106 = vmul.f32 %v1090, %v1090
    %v1107 = vmul.f32 %v1091, %v1091
    %v1108 = vmul.f32 %v1092, %v1092
    %v1109 = vsel %vm1038, %v1093, 0.0
    %v1110 = vsel %vm1038, %v1094, 0.0
    %v1111 = vadd.f32 %v1109, %v1110
    %v1112 = vsel %vm1038, %v1095, 0.0
    %v1113 = vadd.f32 %v1111, %v1112
    %v1114 = vsel %vm1038, %v1096, 0.0
    %v1115 = vadd.f32 %v1113, %v1114
    %v1116 = vsel %vm1038, %v1097, 0.0
    %v1117 = vadd.f32 %v1115, %v1116
    %v1118 = vsel %vm1038, %v1098, 0.0
    %v1119 = vadd.f32 %v1117, %v1118
    %v1120 = vsel %vm1038, %v1099, 0.0
    %v1121 = vadd.f32 %v1119, %v1120
    %v1122 = vsel %vm1038, %v1100, 0.0
    %v1123 = vadd.f32 %v1121, %v1122
    %v1124 = vsel %vm1038, %v1101, 0.0
    %v1125 = vadd.f32 %v1123, %v1124
    %v1126 = vsel %vm1038, %v1102, 0.0
    %v1127 = vadd.f32 %v1125, %v1126
    %v1128 = vsel %vm1038, %v1103, 0.0
    %v1129 = vadd.f32 %v1127, %v1128
    %v1130 = vsel %vm1038, %v1104, 0.0
    %v1131 = vadd.f32 %v1129, %v1130
    %v1132 = vsel %vm1038, %v1105, 0.0
    %v1133 = vadd.f32 %v1131, %v1132
    %v1134 = vsel %vm1038, %v1106, 0.0
    %v1135 = vadd.f32 %v1133, %v1134
    %v1136 = vsel %vm1038, %v1107, 0.0
    %v1137 = vadd.f32 %v1135, %v1136
    %v1138 = vsel %vm1038, %v1108, 0.0
    %v1139 = vadd.f32 %v1137, %v1138
    %v1140 = vrot.slane %v1139, 4
    %v1141 = vadd.f32 %v1139, %v1140
    %v1142 = vrot.slane %v1141, 2
    %v1143 = vadd.f32 %v1141, %v1142
    %v1144 = vrot.slane %v1143, 1
    %v1145 = vadd.f32 %v1143, %v1144
    %v1146 = vmul.f32 %v1145, 0.0078125
    %v1147 = vld [vmem:[%s2] sm:$0x1]
    %v1148 = vadd.f32 %v1146, 1e-05
    %v1149 = vrsqrt.pop %v1148
    %v1150 = vmul.f32 %v1147, %v1149
    %v1152 = vlaneseq
    %v1153 = vshrl.u32 %v1152, 7
    %v1154 = vsub.s32 0, %v1153
    %v1155 = vrot.slane %v1150, %v1154
    %v1157 = vmul.f32 %v1077, %v1155
    %v1158 = vmul.f32 %v1078, %v1155
    %v1159 = vmul.f32 %v1079, %v1155
    %v1160 = vmul.f32 %v1080, %v1155
    %v1161 = vmul.f32 %v1081, %v1155
    %v1162 = vmul.f32 %v1082, %v1155
    %v1163 = vmul.f32 %v1083, %v1155
    %v1164 = vmul.f32 %v1084, %v1155
    %v1165 = vmul.f32 %v1085, %v1155
    %v1166 = vmul.f32 %v1086, %v1155
    %v1167 = vmul.f32 %v1087, %v1155
    %v1168 = vmul.f32 %v1088, %v1155
    %v1169 = vmul.f32 %v1089, %v1155
    %v1170 = vmul.f32 %v1090, %v1155
    %v1171 = vmul.f32 %v1091, %v1155
    %v1172 = vmul.f32 %v1092, %v1155
    %v1173 = vld [vmem:[%s3] sm:$0x1]
    %v1175 = vlaneseq
    %v1176 = vshrl.u32 %v1175, 7
    %v1177 = vsub.s32 0, %v1176
    %v1178 = vrot.slane %v1173, %v1177
    %v1180 = vadd.f32 %v1157, %v1178
    %v1181 = vadd.f32 %v1158, %v1178
    %v1182 = vadd.f32 %v1159, %v1178
    %v1183 = vadd.f32 %v1160, %v1178
    %v1184 = vadd.f32 %v1161, %v1178
    %v1185 = vadd.f32 %v1162, %v1178
    %v1186 = vadd.f32 %v1163, %v1178
    %v1187 = vadd.f32 %v1164, %v1178
    %v1188 = vadd.f32 %v1165, %v1178
    %v1189 = vadd.f32 %v1166, %v1178
    %v1190 = vadd.f32 %v1167, %v1178
    %v1191 = vadd.f32 %v1168, %v1178
    %v1192 = vadd.f32 %v1169, %v1178
    %v1193 = vadd.f32 %v1170, %v1178
    %v1194 = vadd.f32 %v1171, %v1178
    %v1195 = vadd.f32 %v1172, %v1178
    %v1196 = vmul.f32 %v1180, 0.2
    %v1197 = vmul.f32 %v1181, 0.2
    %v1198 = vmul.f32 %v1182, 0.2
    %v1199 = vmul.f32 %v1183, 0.2
    %v1200 = vmul.f32 %v1184, 0.2
    %v1201 = vmul.f32 %v1185, 0.2
    %v1202 = vmul.f32 %v1186, 0.2
    %v1203 = vmul.f32 %v1187, 0.2
    %v1204 = vmul.f32 %v1188, 0.2
    %v1205 = vmul.f32 %v1189, 0.2
    %v1206 = vmul.f32 %v1190, 0.2
    %v1207 = vmul.f32 %v1191, 0.2
    %v1208 = vmul.f32 %v1192, 0.2
    %v1209 = vmul.f32 %v1193, 0.2
    %v1210 = vmul.f32 %v1194, 0.2
    %v1211 = vmul.f32 %v1195, 0.2
    %v1212 = vmax.f32 %v1180, %v1196
    %v1213 = vmax.f32 %v1181, %v1197
    %v1214 = vmax.f32 %v1182, %v1198
    %v1215 = vmax.f32 %v1183, %v1199
    %v1216 = vmax.f32 %v1184, %v1200
    %v1217 = vmax.f32 %v1185, %v1201
    %v1218 = vmax.f32 %v1186, %v1202
    %v1219 = vmax.f32 %v1187, %v1203
    %v1220 = vmax.f32 %v1188, %v1204
    %v1221 = vmax.f32 %v1189, %v1205
    %v1222 = vmax.f32 %v1190, %v1206
    %v1223 = vmax.f32 %v1191, %v1207
    %v1224 = vmax.f32 %v1192, %v1208
    %v1225 = vmax.f32 %v1193, %v1209
    %v1226 = vmax.f32 %v1194, %v1210
    %v1227 = vmax.f32 %v1195, %v1211
    %vm1228 = vcmask 57344
    %1229 = vst.msk [vmem:[#allocation3] sm:$0x1] %vm1228, 0.0
    %1230 = vst.msk [vmem:[#allocation3 + $0x81] sm:$0x1] %vm1228, 0.0
    %1231 = vst.msk [vmem:[#allocation3 + $0x1] sm:$0xff] %vm1038, %v1212
    %1232 = vst.msk [vmem:[#allocation3 + $0x9] sm:$0xff] %vm1038, %v1213
    %1233 = vst.msk [vmem:[#allocation3 + $0x11] sm:$0xff] %vm1038, %v1214
    %1234 = vst.msk [vmem:[#allocation3 + $0x19] sm:$0xff] %vm1038, %v1215
    %1235 = vst.msk [vmem:[#allocation3 + $0x21] sm:$0xff] %vm1038, %v1216
    %1236 = vst.msk [vmem:[#allocation3 + $0x29] sm:$0xff] %vm1038, %v1217
    %1237 = vst.msk [vmem:[#allocation3 + $0x31] sm:$0xff] %vm1038, %v1218
    %1238 = vst.msk [vmem:[#allocation3 + $0x39] sm:$0xff] %vm1038, %v1219
    %1239 = vst.msk [vmem:[#allocation3 + $0x41] sm:$0xff] %vm1038, %v1220
    %1240 = vst.msk [vmem:[#allocation3 + $0x49] sm:$0xff] %vm1038, %v1221
    %1241 = vst.msk [vmem:[#allocation3 + $0x51] sm:$0xff] %vm1038, %v1222
    %1242 = vst.msk [vmem:[#allocation3 + $0x59] sm:$0xff] %vm1038, %v1223
    %1243 = vst.msk [vmem:[#allocation3 + $0x61] sm:$0xff] %vm1038, %v1224
    %1244 = vst.msk [vmem:[#allocation3 + $0x69] sm:$0xff] %vm1038, %v1225
    %1245 = vst.msk [vmem:[#allocation3 + $0x71] sm:$0xff] %vm1038, %v1226
    %1246 = vst.msk [vmem:[#allocation3 + $0x79] sm:$0xff] %vm1038, %v1227
    %v1247 = vld [vmem:[#allocation3] ss:$2 sm:$0xff]
    %s1248 = scalar_lea.vmem [#allocation3], 16
    %v1249 = vld [vmem:[%s1248] ss:$2 sm:$0xff]
    %s1250 = scalar_lea.vmem [#allocation3], 32
    %v1251 = vld [vmem:[%s1250] ss:$2 sm:$0xff]
    %s1252 = scalar_lea.vmem [#allocation3], 48
    %v1253 = vld [vmem:[%s1252] ss:$2 sm:$0xff]
    %s1254 = scalar_lea.vmem [#allocation3], 64
    %v1255 = vld [vmem:[%s1254] ss:$2 sm:$0xff]
    %s1256 = scalar_lea.vmem [#allocation3], 80
    %v1257 = vld [vmem:[%s1256] ss:$2 sm:$0xff]
    %s1258 = scalar_lea.vmem [#allocation3], 96
    %v1259 = vld [vmem:[%s1258] ss:$2 sm:$0xff]
    %s1260 = scalar_lea.vmem [#allocation3], 112
    %v1261 = vld [vmem:[%s1260] ss:$2 sm:$0xff]
    %v1262 = vld [vmem:[%s9] sm:$0xff]
    %v1263 = vld [vmem:[%s9 + $0x8] sm:$0xff]
    %v1264 = vld [vmem:[%s9 + $0x10] sm:$0xff]
    %v1265 = vld [vmem:[%s9 + $0x18] sm:$0xff]
    %v1266 = vld [vmem:[%s9 + $0x20] sm:$0xff]
    %v1267 = vld [vmem:[%s9 + $0x28] sm:$0xff]
    %v1268 = vld [vmem:[%s9 + $0x30] sm:$0xff]
    %v1269 = vld [vmem:[%s9 + $0x38] sm:$0xff]
    %1271 = vset.pattern.permute.xlu0 0
    %1272 = vperm.xlu0 %1271, %v1262
    %v1273 = vpop.permute.xlu0 %1272
    %1276 = vset.pattern.permute.xlu0 0
    %1277 = vperm.xlu0 %1276, %v1263
    %v1278 = vpop.permute.xlu0 %1277
    %1281 = vset.pattern.permute.xlu0 0
    %1282 = vperm.xlu0 %1281, %v1264
    %v1283 = vpop.permute.xlu0 %1282
    %1286 = vset.pattern.permute.xlu0 0
    %1287 = vperm.xlu0 %1286, %v1265
    %v1288 = vpop.permute.xlu0 %1287
    %1291 = vset.pattern.permute.xlu0 0
    %1292 = vperm.xlu0 %1291, %v1266
    %v1293 = vpop.permute.xlu0 %1292
    %1296 = vset.pattern.permute.xlu0 0
    %1297 = vperm.xlu0 %1296, %v1267
    %v1298 = vpop.permute.xlu0 %1297
    %1301 = vset.pattern.permute.xlu0 0
    %1302 = vperm.xlu0 %1301, %v1268
    %v1303 = vpop.permute.xlu0 %1302
    %1306 = vset.pattern.permute.xlu0 0
    %1307 = vperm.xlu0 %1306, %v1269
    %v1308 = vpop.permute.xlu0 %1307
    %v1310 = vmul.f32 %v1247, %v1273
    %v1311 = vmul.f32 %v1249, %v1278
    %v1312 = vmul.f32 %v1251, %v1283
    %v1313 = vmul.f32 %v1253, %v1288
    %v1314 = vmul.f32 %v1255, %v1293
    %v1315 = vmul.f32 %v1257, %v1298
    %v1316 = vmul.f32 %v1259, %v1303
    %v1317 = vmul.f32 %v1261, %v1308
    %v1318 = vpack.c.bf16 %v1311, %v1310
    %v1319 = vpack.c.bf16 %v1313, %v1312
    %v1320 = vpack.c.bf16 %v1315, %v1314
    %v1321 = vpack.c.bf16 %v1317, %v1316
    %v1322 = vld [vmem:[%s6] sm:$0xf]
    %s1323 = scalar_lea.vmem [#allocation3], 1
    %v1324 = vld [vmem:[%s1323] ss:$2 sm:$0xff]
    %s1325 = scalar_lea.vmem [#allocation3], 17
    %v1326 = vld [vmem:[%s1325] ss:$2 sm:$0xff]
    %s1327 = scalar_lea.vmem [#allocation3], 33
    %v1328 = vld [vmem:[%s1327] ss:$2 sm:$0xff]
    %s1329 = scalar_lea.vmem [#allocation3], 49
    %v1330 = vld [vmem:[%s1329] ss:$2 sm:$0xff]
    %s1331 = scalar_lea.vmem [#allocation3], 65
    %v1332 = vld [vmem:[%s1331] ss:$2 sm:$0xff]
    %s1333 = scalar_lea.vmem [#allocation3], 81
    %v1334 = vld [vmem:[%s1333] ss:$2 sm:$0xff]
    %s1335 = scalar_lea.vmem [#allocation3], 97
    %v1336 = vld [vmem:[%s1335] ss:$2 sm:$0xff]
    %s1337 = scalar_lea.vmem [#allocation3], 113
    %v1338 = vld [vmem:[%s1337] ss:$2 sm:$0xff]
    %v1339 = vpack.c.bf16 %v1326, %v1324
    %v1340 = vpack.c.bf16 %v1330, %v1328
    %v1341 = vpack.c.bf16 %v1334, %v1332
    %v1342 = vpack.c.bf16 %v1338, %v1336
    %s1343 = scalar_lea.vmem %s6, 4
    %v1344 = vld [vmem:[%s1343] sm:$0xf]
    %v1346 = vsel %vm1038, %v1339, 0
    %v1349 = vsel %vm1038, %v1340, 0
    %v1352 = vsel %vm1038, %v1341, 0
    %v1355 = vsel %vm1038, %v1342, 0
    %vm1357 = vcmask 1043456
    %v1359 = vsel %vm1357, %v1344, 0
    %1361 = vmatprep.subr.bf16.mxu0 0
    %1362 = vmatpush1.bf16.msra.mxu0 %v1359
    %1363 = vmatprep.subr.bf16.mxu0 0
    %1364 = vmatpush1.bf16.msra.mxu0 0
    %1365 = vmatprep.subr.bf16.mxu0 0
    %1366 = vmatpush1.bf16.msra.mxu0 0
    %1367 = vmatprep.subr.bf16.mxu0 0
    %1368 = vmatpush1.bf16.msra.mxu0 0
    %1369 = vmatprep.subr.bf16.mxu0 0
    %1370 = vmatpush1.bf16.msra.mxu0 0
    %1371 = vmatprep.subr.bf16.mxu0 0
    %1372 = vmatpush1.bf16.msra.mxu0 0
    %1373 = vmatprep.subr.bf16.mxu0 0
    %1374 = vmatpush1.bf16.msra.mxu0 0
    %1375 = vmatprep.subr.bf16.mxu0 0
    %1376 = vmatpush1.bf16.msra.mxu0 0
    %1377 = vmatprep.subr.bf16.mxu0 0
    %1378 = vmatpush1.bf16.msra.mxu0 0
    %1379 = vmatprep.subr.bf16.mxu0 0
    %1380 = vmatpush1.bf16.msra.mxu0 0
    %1381 = vmatprep.subr.bf16.mxu0 0
    %1382 = vmatpush1.bf16.msra.mxu0 0
    %1383 = vmatprep.subr.bf16.mxu0 0
    %1384 = vmatpush1.bf16.msra.mxu0 0
    %1385 = vmatprep.subr.bf16.mxu0 0
    %1386 = vmatpush1.bf16.msra.mxu0 0
    %1387 = vmatprep.subr.bf16.mxu0 0
    %1388 = vmatpush1.bf16.msra.mxu0 0
    %1389 = vmatprep.subr.bf16.mxu0 0
    %1390 = vmatpush1.bf16.msra.mxu0 0
    %1391 = vmatprep.subr.bf16.mxu0 0
    %1392 = vmatpush1.bf16.msra.mxu0 0
    %1393 = vmatprep.mubr.bf16.mxu0 0
    %1394 = vmatmul.mubr.bf16.gmra.mrb[0].mxu0 %v1346
    %v1395 = vpop.f32.mrb[0].mxu0
    %v1396 = vadd.f32 0.0, %v1395
    %v1397 = vpop.f32.mrb[0].mxu0
    %v1398 = vpop.f32.mrb[0].mxu0
    %v1399 = vadd.f32 0.0, %v1398
    %v1400 = vpop.f32.mrb[0].mxu0
    %1401 = vmatprep.mubr.bf16.mxu0 0
    %1402 = vmatmul.mubr.bf16.gmra.mrb[0].mxu0 %v1349
    %v1403 = vpop.f32.mrb[0].mxu0
    %v1404 = vadd.f32 0.0, %v1403
    %v1405 = vpop.f32.mrb[0].mxu0
    %v1406 = vpop.f32.mrb[0].mxu0
    %v1407 = vadd.f32 0.0, %v1406
    %v1408 = vpop.f32.mrb[0].mxu0
    %1409 = vmatprep.mubr.bf16.mxu0 0
    %1410 = vmatmul.mubr.bf16.gmra.mrb[0].mxu0 %v1352
    %v1411 = vpop.f32.mrb[0].mxu0
    %v1412 = vadd.f32 0.0, %v1411
    %v1413 = vpop.f32.mrb[0].mxu0
    %v1414 = vpop.f32.mrb[0].mxu0
    %v1415 = vadd.f32 0.0, %v1414
    %v1416 = vpop.f32.mrb[0].mxu0
    %1417 = vmatprep.mubr.bf16.mxu0 0
    %1418 = vmatmul.mubr.bf16.gmra.mrb[0].mxu0 %v1355
    %v1419 = vpop.f32.mrb[0].mxu0
    %v1420 = vadd.f32 0.0, %v1419
    %v1421 = vpop.f32.mrb[0].mxu0
    %v1422 = vpop.f32.mrb[0].mxu0
    %v1423 = vadd.f32 0.0, %v1422
    %v1424 = vpop.f32.mrb[0].mxu0
    %1425 = vdwg.mxu0
    %v1427 = vsel %vm1038, %v1318, 0
    %v1430 = vsel %vm1038, %v1319, 0
    %v1433 = vsel %vm1038, %v1320, 0
    %v1436 = vsel %vm1038, %v1321, 0
    %v1439 = vsel %vm1357, %v1322, 0
    %1441 = vmatprep.subr.bf16.mxu0 0
    %1442 = vmatpush1.bf16.msra.mxu0 %v1439
    %1443 = vmatprep.subr.bf16.mxu0 0
    %1444 = vmatpush1.bf16.msra.mxu0 0
    %1445 = vmatprep.subr.bf16.mxu0 0
    %1446 = vmatpush1.bf16.msra.mxu0 0
    %1447 = vmatprep.subr.bf16.mxu0 0
    %1448 = vmatpush1.bf16.msra.mxu0 0
    %1449 = vmatprep.subr.bf16.mxu0 0
    %1450 = vmatpush1.bf16.msra.mxu0 0
    %1451 = vmatprep.subr.bf16.mxu0 0
    %1452 = vmatpush1.bf16.msra.mxu0 0
    %1453 = vmatprep.subr.bf16.mxu0 0
    %1454 = vmatpush1.bf16.msra.mxu0 0
    %1455 = vmatprep.subr.bf16.mxu0 0
    %1456 = vmatpush1.bf16.msra.mxu0 0
    %1457 = vmatprep.subr.bf16.mxu0 0
    %1458 = vmatpush1.bf16.msra.mxu0 0
    %1459 = vmatprep.subr.bf16.mxu0 0
    %1460 = vmatpush1.bf16.msra.mxu0 0
    %1461 = vmatprep.subr.bf16.mxu0 0
    %1462 = vmatpush1.bf16.msra.mxu0 0
    %1463 = vmatprep.subr.bf16.mxu0 0
    %1464 = vmatpush1.bf16.msra.mxu0 0
    %1465 = vmatprep.subr.bf16.mxu0 0
    %1466 = vmatpush1.bf16.msra.mxu0 0
    %1467 = vmatprep.subr.bf16.mxu0 0
    %1468 = vmatpush1.bf16.msra.mxu0 0
    %1469 = vmatprep.subr.bf16.mxu0 0
    %1470 = vmatpush1.bf16.msra.mxu0 0
    %1471 = vmatprep.subr.bf16.mxu0 0
    %1472 = vmatpush1.bf16.msra.mxu0 0
    %1473 = vmatprep.mubr.bf16.mxu0 0
    %1474 = vmatmul.mubr.bf16.gmra.mrb[0].mxu0 %v1427
    %v1475 = vpop.f32.mrb[0].mxu0
    %v1476 = vadd.f32 %v1396, %v1475
    %v1477 = vpop.f32.mrb[0].mxu0
    %v1478 = vpop.f32.mrb[0].mxu0
    %v1479 = vadd.f32 %v1399, %v1478
    %v1480 = vpop.f32.mrb[0].mxu0
    %1481 = vmatprep.mubr.bf16.mxu0 0
    %1482 = vmatmul.mubr.bf16.gmra.mrb[0].mxu0 %v1430
    %v1483 = vpop.f32.mrb[0].mxu0
    %v1484 = vadd.f32 %v1404, %v1483
    %v1485 = vpop.f32.mrb[0].mxu0
    %v1486 = vpop.f32.mrb[0].mxu0
    %v1487 = vadd.f32 %v1407, %v1486
    %v1488 = vpop.f32.mrb[0].mxu0
    %1489 = vmatprep.mubr.bf16.mxu0 0
    %1490 = vmatmul.mubr.bf16.gmra.mrb[0].mxu0 %v1433
    %v1491 = vpop.f32.mrb[0].mxu0
    %v1492 = vadd.f32 %v1412, %v1491
    %v1493 = vpop.f32.mrb[0].mxu0
    %v1494 = vpop.f32.mrb[0].mxu0
    %v1495 = vadd.f32 %v1415, %v1494
    %v1496 = vpop.f32.mrb[0].mxu0
    %1497 = vmatprep.mubr.bf16.mxu0 0
    %1498 = vmatmul.mubr.bf16.gmra.mrb[0].mxu0 %v1436
    %v1499 = vpop.f32.mrb[0].mxu0
    %v1500 = vadd.f32 %v1420, %v1499
    %v1501 = vpop.f32.mrb[0].mxu0
    %v1502 = vpop.f32.mrb[0].mxu0
    %v1503 = vadd.f32 %v1423, %v1502
    %v1504 = vpop.f32.mrb[0].mxu0
    %1505 = vdwg.mxu0
    %s1506 = scalar_lea.vmem [#allocation3], 2
    %v1507 = vld [vmem:[%s1506] ss:$2 sm:$0xff]
    %s1508 = scalar_lea.vmem [#allocation3], 18
    %v1509 = vld [vmem:[%s1508] ss:$2 sm:$0xff]
    %s1510 = scalar_lea.vmem [#allocation3], 34
    %v1511 = vld [vmem:[%s1510] ss:$2 sm:$0xff]
    %s1512 = scalar_lea.vmem [#allocation3], 50
    %v1513 = vld [vmem:[%s1512] ss:$2 sm:$0xff]
    %s1514 = scalar_lea.vmem [#allocation3], 66
    %v1515 = vld [vmem:[%s1514] ss:$2 sm:$0xff]
    %s1516 = scalar_lea.vmem [#allocation3], 82
    %v1517 = vld [vmem:[%s1516] ss:$2 sm:$0xff]
    %s1518 = scalar_lea.vmem [#allocation3], 98
    %v1519 = vld [vmem:[%s1518] ss:$2 sm:$0xff]
    %s1520 = scalar_lea.vmem [#allocation3], 114
    %v1521 = vld [vmem:[%s1520] ss:$2 sm:$0xff]
    %v1522 = vpack.c.bf16 %v1509, %v1507
    %v1523 = vpack.c.bf16 %v1513, %v1511
    %v1524 = vpack.c.bf16 %v1517, %v1515
    %v1525 = vpack.c.bf16 %v1521, %v1519
    %s1526 = scalar_lea.vmem %s6, 8
    %v1527 = vld [vmem:[%s1526] sm:$0xf]
    %v1529 = vsel %vm1038, %v1522, 0
    %v1532 = vsel %vm1038, %v1523, 0
    %v1535 = vsel %vm1038, %v1524, 0
    %v1538 = vsel %vm1038, %v1525, 0
    %v1541 = vsel %vm1357, %v1527, 0
    %1543 = vmatprep.subr.bf16.mxu0 0
    %1544 = vmatpush1.bf16.msra.mxu0 %v1541
    %1545 = vmatprep.subr.bf16.mxu0 0
    %1546 = vmatpush1.bf16.msra.mxu0 0
    %1547 = vmatprep.subr.bf16.mxu0 0
    %1548 = vmatpush1.bf16.msra.mxu0 0
    %1549 = vmatprep.subr.bf16.mxu0 0
    %1550 = vmatpush1.bf16.msra.mxu0 0
    %1551 = vmatprep.subr.bf16.mxu0 0
    %1552 = vmatpush1.bf16.msra.mxu0 0
    %1553 = vmatprep.subr.bf16.mxu0 0
    %1554 = vmatpush1.bf16.msra.mxu0 0
    %1555 = vmatprep.subr.bf16.mxu0 0
    %1556 = vmatpush1.bf16.msra.mxu0 0
    %1557 = vmatprep.subr.bf16.mxu0 0
    %1558 = vmatpush1.bf16.msra.mxu0 0
    %1559 = vmatprep.subr.bf16.mxu0 0
    %1560 = vmatpush1.bf16.msra.mxu0 0
    %1561 = vmatprep.subr.bf16.mxu0 0
    %1562 = vmatpush1.bf16.msra.mxu0 0
    %1563 = vmatprep.subr.bf16.mxu0 0
    %1564 = vmatpush1.bf16.msra.mxu0 0
    %1565 = vmatprep.subr.bf16.mxu0 0
    %1566 = vmatpush1.bf16.msra.mxu0 0
    %1567 = vmatprep.subr.bf16.mxu0 0
    %1568 = vmatpush1.bf16.msra.mxu0 0
    %1569 = vmatprep.subr.bf16.mxu0 0
    %1570 = vmatpush1.bf16.msra.mxu0 0
    %1571 = vmatprep.subr.bf16.mxu0 0
    %1572 = vmatpush1.bf16.msra.mxu0 0
    %1573 = vmatprep.subr.bf16.mxu0 0
    %1574 = vmatpush1.bf16.msra.mxu0 0
    %1575 = vmatprep.mubr.bf16.mxu0 0
    %1576 = vmatmul.mubr.bf16.gmra.mrb[0].mxu0 %v1529
    %v1577 = vpop.f32.mrb[0].mxu0
    %v1578 = vadd.f32 0.0, %v1577
    %v1579 = vpop.f32.mrb[0].mxu0
    %v1580 = vpop.f32.mrb[0].mxu0
    %v1581 = vadd.f32 0.0, %v1580
    %v1582 = vpop.f32.mrb[0].mxu0
    %1583 = vmatprep.mubr.bf16.mxu0 0
    %1584 = vmatmul.mubr.bf16.gmra.mrb[0].mxu0 %v1532
    %v1585 = vpop.f32.mrb[0].mxu0
    %v1586 = vadd.f32 0.0, %v1585
    %v1587 = vpop.f32.mrb[0].mxu0
    %v1588 = vpop.f32.mrb[0].mxu0
    %v1589 = vadd.f32 0.0, %v1588
    %v1590 = vpop.f32.mrb[0].mxu0
    %1591 = vmatprep.mubr.bf16.mxu0 0
    %1592 = vmatmul.mubr.bf16.gmra.mrb[0].mxu0 %v1535
    %v1593 = vpop.f32.mrb[0].mxu0
    %v1594 = vadd.f32 0.0, %v1593
    %v1595 = vpop.f32.mrb[0].mxu0
    %v1596 = vpop.f32.mrb[0].mxu0
    %v1597 = vadd.f32 0.0, %v1596
    %v1598 = vpop.f32.mrb[0].mxu0
    %1599 = vmatprep.mubr.bf16.mxu0 0
    %1600 = vmatmul.mubr.bf16.gmra.mrb[0].mxu0 %v1538
    %v1601 = vpop.f32.mrb[0].mxu0
    %v1602 = vadd.f32 0.0, %v1601
    %v1603 = vpop.f32.mrb[0].mxu0
    %v1604 = vpop.f32.mrb[0].mxu0
    %v1605 = vadd.f32 0.0, %v1604
    %v1606 = vpop.f32.mrb[0].mxu0
    %1607 = vdwg.mxu0
    %v1608 = vadd.f32 %v1476, %v1578
    %v1609 = vadd.f32 %v1479, %v1581
    %v1610 = vadd.f32 %v1484, %v1586
    %v1611 = vadd.f32 %v1487, %v1589
    %v1612 = vadd.f32 %v1492, %v1594
    %v1613 = vadd.f32 %v1495, %v1597
    %v1614 = vadd.f32 %v1500, %v1602
    %v1615 = vadd.f32 %v1503, %v1605
    %s1616 = scalar_lea.vmem [#allocation3], 3
    %v1617 = vld [vmem:[%s1616] ss:$2 sm:$0xff]
    %s1618 = scalar_lea.vmem [#allocation3], 19
    %v1619 = vld [vmem:[%s1618] ss:$2 sm:$0xff]
    %s1620 = scalar_lea.vmem [#allocation3], 35
    %v1621 = vld [vmem:[%s1620] ss:$2 sm:$0xff]
    %s1622 = scalar_lea.vmem [#allocation3], 51
    %v1623 = vld [vmem:[%s1622] ss:$2 sm:$0xff]
    %s1624 = scalar_lea.vmem [#allocation3], 67
    %v1625 = vld [vmem:[%s1624] ss:$2 sm:$0xff]
    %s1626 = scalar_lea.vmem [#allocation3], 83
    %v1627 = vld [vmem:[%s1626] ss:$2 sm:$0xff]
    %s1628 = scalar_lea.vmem [#allocation3], 99
    %v1629 = vld [vmem:[%s1628] ss:$2 sm:$0xff]
    %s1630 = scalar_lea.vmem [#allocation3], 115
    %v1631 = vld [vmem:[%s1630] ss:$2 sm:$0xff]
    %v1632 = vld [vmem:[%s10] sm:$0xff]
    %v1633 = vld [vmem:[%s10 + $0x8] sm:$0xff]
    %v1634 = vld [vmem:[%s10 + $0x10] sm:$0xff]
    %v1635 = vld [vmem:[%s10 + $0x18] sm:$0xff]
    %v1636 = vld [vmem:[%s10 + $0x20] sm:$0xff]
    %v1637 = vld [vmem:[%s10 + $0x28] sm:$0xff]
    %v1638 = vld [vmem:[%s10 + $0x30] sm:$0xff]
    %v1639 = vld [vmem:[%s10 + $0x38] sm:$0xff]
    %1641 = vset.pattern.permute.xlu0 0
    %1642 = vperm.xlu0 %1641, %v1632
    %v1643 = vpop.permute.xlu0 %1642
    %1646 = vset.pattern.permute.xlu0 0
    %1647 = vperm.xlu0 %1646, %v1633
    %v1648 = vpop.permute.xlu0 %1647
    %1651 = vset.pattern.permute.xlu0 0
    %1652 = vperm.xlu0 %1651, %v1634
    %v1653 = vpop.permute.xlu0 %1652
    %1656 = vset.pattern.permute.xlu0 0
    %1657 = vperm.xlu0 %1656, %v1635
    %v1658 = vpop.permute.xlu0 %1657
    %1661 = vset.pattern.permute.xlu0 0
    %1662 = vperm.xlu0 %1661, %v1636
    %v1663 = vpop.permute.xlu0 %1662
    %1666 = vset.pattern.permute.xlu0 0
    %1667 = vperm.xlu0 %1666, %v1637
    %v1668 = vpop.permute.xlu0 %1667
    %1671 = vset.pattern.permute.xlu0 0
    %1672 = vperm.xlu0 %1671, %v1638
    %v1673 = vpop.permute.xlu0 %1672
    %1676 = vset.pattern.permute.xlu0 0
    %1677 = vperm.xlu0 %1676, %v1639
    %v1678 = vpop.permute.xlu0 %1677
    %v1680 = vmul.f32 %v1617, %v1643
    %v1681 = vmul.f32 %v1619, %v1648
    %v1682 = vmul.f32 %v1621, %v1653
    %v1683 = vmul.f32 %v1623, %v1658
    %v1684 = vmul.f32 %v1625, %v1663
    %v1685 = vmul.f32 %v1627, %v1668
    %v1686 = vmul.f32 %v1629, %v1673
    %v1687 = vmul.f32 %v1631, %v1678
    %v1688 = vpack.c.bf16 %v1681, %v1680
    %v1689 = vpack.c.bf16 %v1683, %v1682
    %v1690 = vpack.c.bf16 %v1685, %v1684
    %v1691 = vpack.c.bf16 %v1687, %v1686
    %s1692 = scalar_lea.vmem %s6, 12
    %v1693 = vld [vmem:[%s1692] sm:$0xf]
    %v1695 = vsel %vm1038, %v1688, 0
    %v1698 = vsel %vm1038, %v1689, 0
    %v1701 = vsel %vm1038, %v1690, 0
    %v1704 = vsel %vm1038, %v1691, 0
    %v1707 = vsel %vm1357, %v1693, 0
    %1709 = vmatprep.subr.bf16.mxu0 0
    %1710 = vmatpush1.bf16.msra.mxu0 %v1707
    %1711 = vmatprep.subr.bf16.mxu0 0
    %1712 = vmatpush1.bf16.msra.mxu0 0
    %1713 = vmatprep.subr.bf16.mxu0 0
    %1714 = vmatpush1.bf16.msra.mxu0 0
    %1715 = vmatprep.subr.bf16.mxu0 0
    %1716 = vmatpush1.bf16.msra.mxu0 0
    %1717 = vmatprep.subr.bf16.mxu0 0
    %1718 = vmatpush1.bf16.msra.mxu0 0
    %1719 = vmatprep.subr.bf16.mxu0 0
    %1720 = vmatpush1.bf16.msra.mxu0 0
    %1721 = vmatprep.subr.bf16.mxu0 0
    %1722 = vmatpush1.bf16.msra.mxu0 0
    %1723 = vmatprep.subr.bf16.mxu0 0
    %1724 = vmatpush1.bf16.msra.mxu0 0
    %1725 = vmatprep.subr.bf16.mxu0 0
    %1726 = vmatpush1.bf16.msra.mxu0 0
    %1727 = vmatprep.subr.bf16.mxu0 0
    %1728 = vmatpush1.bf16.msra.mxu0 0
    %1729 = vmatprep.subr.bf16.mxu0 0
    %1730 = vmatpush1.bf16.msra.mxu0 0
    %1731 = vmatprep.subr.bf16.mxu0 0
    %1732 = vmatpush1.bf16.msra.mxu0 0
    %1733 = vmatprep.subr.bf16.mxu0 0
    %1734 = vmatpush1.bf16.msra.mxu0 0
    %1735 = vmatprep.subr.bf16.mxu0 0
    %1736 = vmatpush1.bf16.msra.mxu0 0
    %1737 = vmatprep.subr.bf16.mxu0 0
    %1738 = vmatpush1.bf16.msra.mxu0 0
    %1739 = vmatprep.subr.bf16.mxu0 0
    %1740 = vmatpush1.bf16.msra.mxu0 0
    %1741 = vmatprep.mubr.bf16.mxu0 0
    %1742 = vmatmul.mubr.bf16.gmra.mrb[0].mxu0 %v1695
    %v1743 = vpop.f32.mrb[0].mxu0
    %v1744 = vadd.f32 0.0, %v1743
    %v1745 = vpop.f32.mrb[0].mxu0
    %v1746 = vpop.f32.mrb[0].mxu0
    %v1747 = vadd.f32 0.0, %v1746
    %v1748 = vpop.f32.mrb[0].mxu0
    %1749 = vmatprep.mubr.bf16.mxu0 0
    %1750 = vmatmul.mubr.bf16.gmra.mrb[0].mxu0 %v1698
    %v1751 = vpop.f32.mrb[0].mxu0
    %v1752 = vadd.f32 0.0, %v1751
    %v1753 = vpop.f32.mrb[0].mxu0
    %v1754 = vpop.f32.mrb[0].mxu0
    %v1755 = vadd.f32 0.0, %v1754
    %v1756 = vpop.f32.mrb[0].mxu0
    %1757 = vmatprep.mubr.bf16.mxu0 0
    %1758 = vmatmul.mubr.bf16.gmra.mrb[0].mxu0 %v1701
    %v1759 = vpop.f32.mrb[0].mxu0
    %v1760 = vadd.f32 0.0, %v1759
    %v1761 = vpop.f32.mrb[0].mxu0
    %v1762 = vpop.f32.mrb[0].mxu0
    %v1763 = vadd.f32 0.0, %v1762
    %v1764 = vpop.f32.mrb[0].mxu0
    %1765 = vmatprep.mubr.bf16.mxu0 0
    %1766 = vmatmul.mubr.bf16.gmra.mrb[0].mxu0 %v1704
    %v1767 = vpop.f32.mrb[0].mxu0
    %v1768 = vadd.f32 0.0, %v1767
    %v1769 = vpop.f32.mrb[0].mxu0
    %v1770 = vpop.f32.mrb[0].mxu0
    %v1771 = vadd.f32 0.0, %v1770
    %v1772 = vpop.f32.mrb[0].mxu0
    %1773 = vdwg.mxu0
    %v1774 = vadd.f32 %v1608, %v1744
    %v1775 = vadd.f32 %v1609, %v1747
    %v1776 = vadd.f32 %v1610, %v1752
    %v1777 = vadd.f32 %v1611, %v1755
    %v1778 = vadd.f32 %v1612, %v1760
    %v1779 = vadd.f32 %v1613, %v1763
    %v1780 = vadd.f32 %v1614, %v1768
    %v1781 = vadd.f32 %v1615, %v1771
    %vm1782 = vcmask 130048
    %v1783 = vsel %vm1782, %v1774, 0.0
    %v1784 = vsel %vm1782, %v1775, 0.0
    %v1785 = vadd.f32 %v1783, %v1784
    %v1786 = vsel %vm1782, %v1776, 0.0
    %v1787 = vadd.f32 %v1785, %v1786
    %v1788 = vsel %vm1782, %v1777, 0.0
    %v1789 = vadd.f32 %v1787, %v1788
    %v1790 = vsel %vm1782, %v1778, 0.0
    %v1791 = vadd.f32 %v1789, %v1790
    %v1792 = vsel %vm1782, %v1779, 0.0
    %v1793 = vadd.f32 %v1791, %v1792
    %v1794 = vsel %vm1782, %v1780, 0.0
    %v1795 = vadd.f32 %v1793, %v1794
    %v1796 = vsel %vm1782, %v1781, 0.0
    %v1797 = vadd.f32 %v1795, %v1796
    %v1798 = vrot.slane %v1797, 4
    %v1799 = vadd.f32 %v1797, %v1798
    %v1800 = vrot.slane %v1799, 2
    %v1801 = vadd.f32 %v1799, %v1800
    %v1802 = vrot.slane %v1801, 1
    %v1803 = vadd.f32 %v1801, %v1802
    %v1804 = vmul.f32 %v1803, 0.015625
    %v1805 = vsub.f32 %v1774, %v1804
    %v1806 = vsub.f32 %v1775, %v1804
    %v1807 = vsub.f32 %v1776, %v1804
    %v1808 = vsub.f32 %v1777, %v1804
    %v1809 = vsub.f32 %v1778, %v1804
    %v1810 = vsub.f32 %v1779, %v1804
    %v1811 = vsub.f32 %v1780, %v1804
    %v1812 = vsub.f32 %v1781, %v1804
    %v1813 = vmul.f32 %v1805, %v1805
    %v1814 = vmul.f32 %v1806, %v1806
    %v1815 = vmul.f32 %v1807, %v1807
    %v1816 = vmul.f32 %v1808, %v1808
    %v1817 = vmul.f32 %v1809, %v1809
    %v1818 = vmul.f32 %v1810, %v1810
    %v1819 = vmul.f32 %v1811, %v1811
    %v1820 = vmul.f32 %v1812, %v1812
    %v1821 = vsel %vm1782, %v1813, 0.0
    %v1822 = vsel %vm1782, %v1814, 0.0
    %v1823 = vadd.f32 %v1821, %v1822
    %v1824 = vsel %vm1782, %v1815, 0.0
    %v1825 = vadd.f32 %v1823, %v1824
    %v1826 = vsel %vm1782, %v1816, 0.0
    %v1827 = vadd.f32 %v1825, %v1826
    %v1828 = vsel %vm1782, %v1817, 0.0
    %v1829 = vadd.f32 %v1827, %v1828
    %v1830 = vsel %vm1782, %v1818, 0.0
    %v1831 = vadd.f32 %v1829, %v1830
    %v1832 = vsel %vm1782, %v1819, 0.0
    %v1833 = vadd.f32 %v1831, %v1832
    %v1834 = vsel %vm1782, %v1820, 0.0
    %v1835 = vadd.f32 %v1833, %v1834
    %v1836 = vrot.slane %v1835, 4
    %v1837 = vadd.f32 %v1835, %v1836
    %v1838 = vrot.slane %v1837, 2
    %v1839 = vadd.f32 %v1837, %v1838
    %v1840 = vrot.slane %v1839, 1
    %v1841 = vadd.f32 %v1839, %v1840
    %v1842 = vmul.f32 %v1841, 0.015625
    %v1843 = vld [vmem:[%s7] sm:$0x1]
    %v1844 = vadd.f32 %v1842, 1e-05
    %v1845 = vrsqrt.pop %v1844
    %v1846 = vmul.f32 %v1843, %v1845
    %v1848 = vlaneseq
    %v1849 = vshrl.u32 %v1848, 7
    %v1850 = vsub.s32 0, %v1849
    %v1851 = vrot.slane %v1846, %v1850
    %v1853 = vmul.f32 %v1805, %v1851
    %v1854 = vmul.f32 %v1806, %v1851
    %v1855 = vmul.f32 %v1807, %v1851
    %v1856 = vmul.f32 %v1808, %v1851
    %v1857 = vmul.f32 %v1809, %v1851
    %v1858 = vmul.f32 %v1810, %v1851
    %v1859 = vmul.f32 %v1811, %v1851
    %v1860 = vmul.f32 %v1812, %v1851
    %v1861 = vld [vmem:[%s8] sm:$0x1]
    %v1863 = vlaneseq
    %v1864 = vshrl.u32 %v1863, 7
    %v1865 = vsub.s32 0, %v1864
    %v1866 = vrot.slane %v1861, %v1865
    %v1868 = vadd.f32 %v1853, %v1866
    %v1869 = vadd.f32 %v1854, %v1866
    %v1870 = vadd.f32 %v1855, %v1866
    %v1871 = vadd.f32 %v1856, %v1866
    %v1872 = vadd.f32 %v1857, %v1866
    %v1873 = vadd.f32 %v1858, %v1866
    %v1874 = vadd.f32 %v1859, %v1866
    %v1875 = vadd.f32 %v1860, %v1866
    %v1876 = vmul.f32 %v1868, 0.2
    %v1877 = vmul.f32 %v1869, 0.2
    %v1878 = vmul.f32 %v1870, 0.2
    %v1879 = vmul.f32 %v1871, 0.2
    %v1880 = vmul.f32 %v1872, 0.2
    %v1881 = vmul.f32 %v1873, 0.2
    %v1882 = vmul.f32 %v1874, 0.2
    %v1883 = vmul.f32 %v1875, 0.2
    %v1884 = vmax.f32 %v1868, %v1876
    %v1885 = vmax.f32 %v1869, %v1877
    %v1886 = vmax.f32 %v1870, %v1878
    %v1887 = vmax.f32 %v1871, %v1879
    %v1888 = vmax.f32 %v1872, %v1880
    %v1889 = vmax.f32 %v1873, %v1881
    %v1890 = vmax.f32 %v1874, %v1882
    %v1891 = vmax.f32 %v1875, %v1883
    %v1892 = vld [vmem:[%s11] sm:$0xff]
    %v1893 = vld [vmem:[%s11 + $0x8] sm:$0xff]
    %v1894 = vld [vmem:[%s11 + $0x10] sm:$0xff]
    %v1895 = vld [vmem:[%s11 + $0x18] sm:$0xff]
    %v1896 = vld [vmem:[%s11 + $0x20] sm:$0xff]
    %v1897 = vld [vmem:[%s11 + $0x28] sm:$0xff]
    %v1898 = vld [vmem:[%s11 + $0x30] sm:$0xff]
    %v1899 = vld [vmem:[%s11 + $0x38] sm:$0xff]
    %v1900 = vmul.f32 %v1884, %v1892
    %v1901 = vmul.f32 %v1885, %v1893
    %v1902 = vmul.f32 %v1886, %v1894
    %v1903 = vmul.f32 %v1887, %v1895
    %v1904 = vmul.f32 %v1888, %v1896
    %v1905 = vmul.f32 %v1889, %v1897
    %v1906 = vmul.f32 %v1890, %v1898
    %v1907 = vmul.f32 %v1891, %v1899
    %v1908 = vld [vmem:[%s12] sm:$0xff]
    %vm1909 = vcmask 523264
    %v1911 = vsel %vm1909, %v1908, 0
    %1913 = vmatprep.subr.mxu0 0.0
    %1914 = vmatpush1.msra.mxu0 %v1900
    %1915 = vmatprep.subr.mxu0 0.0
    %1916 = vmatpush1.msra.mxu0 %v1901
    %1917 = vmatprep.subr.mxu0 0.0
    %1918 = vmatpush1.msra.mxu0 %v1902
    %1919 = vmatprep.subr.mxu0 0.0
    %1920 = vmatpush1.msra.mxu0 %v1903
    %1921 = vmatprep.subr.mxu0 0.0
    %1922 = vmatpush1.msra.mxu0 %v1904
    %1923 = vmatprep.subr.mxu0 0.0
    %1924 = vmatpush1.msra.mxu0 %v1905
    %1925 = vmatprep.subr.mxu0 0.0
    %1926 = vmatpush1.msra.mxu0 %v1906
    %1927 = vmatprep.subr.mxu0 0.0
    %1928 = vmatpush1.msra.mxu0 %v1907
    %1929 = vmatprep.subr.mxu0 0.0
    %1930 = vmatpush1.msra.mxu0 0.0
    %1931 = vmatprep.subr.mxu0 0.0
    %1932 = vmatpush1.msra.mxu0 0.0
    %1933 = vmatprep.subr.mxu0 0.0
    %1934 = vmatpush1.msra.mxu0 0.0
    %1935 = vmatprep.subr.mxu0 0.0
    %1936 = vmatpush1.msra.mxu0 0.0
    %1937 = vmatprep.subr.mxu0 0.0
    %1938 = vmatpush1.msra.mxu0 0.0
    %1939 = vmatprep.subr.mxu0 0.0
    %1940 = vmatpush1.msra.mxu0 0.0
    %1941 = vmatprep.subr.mxu0 0.0
    %1942 = vmatpush1.msra.mxu0 0.0
    %1943 = vmatprep.subr.mxu0 0.0
    %1944 = vmatpush1.msra.mxu0 0.0
    %1945 = vmatprep.subr.mxu0 0.0
    %1946 = vmatpush1.msra.mxu0 0.0
    %1947 = vmatprep.subr.mxu0 0.0
    %1948 = vmatpush1.msra.mxu0 0.0
    %1949 = vmatprep.subr.mxu0 0.0
    %1950 = vmatpush1.msra.mxu0 0.0
    %1951 = vmatprep.subr.mxu0 0.0
    %1952 = vmatpush1.msra.mxu0 0.0
    %1953 = vmatprep.subr.mxu0 0.0
    %1954 = vmatpush1.msra.mxu0 0.0
    %1955 = vmatprep.subr.mxu0 0.0
    %1956 = vmatpush1.msra.mxu0 0.0
    %1957 = vmatprep.subr.mxu0 0.0
    %1958 = vmatpush1.msra.mxu0 0.0
    %1959 = vmatprep.subr.mxu0 0.0
    %1960 = vmatpush1.msra.mxu0 0.0
    %1961 = vmatprep.subr.mxu0 0.0
    %1962 = vmatpush1.msra.mxu0 0.0
    %1963 = vmatprep.subr.mxu0 0.0
    %1964 = vmatpush1.msra.mxu0 0.0
    %1965 = vmatprep.subr.mxu0 0.0
    %1966 = vmatpush1.msra.mxu0 0.0
    %1967 = vmatprep.subr.mxu0 0.0
    %1968 = vmatpush1.msra.mxu0 0.0
    %1969 = vmatprep.subr.mxu0 0.0
    %1970 = vmatpush1.msra.mxu0 0.0
    %1971 = vmatprep.subr.mxu0 0.0
    %1972 = vmatpush1.msra.mxu0 0.0
    %1973 = vmatprep.subr.mxu0 0.0
    %1974 = vmatpush1.msra.mxu0 0.0
    %1975 = vmatprep.subr.mxu0 0.0
    %1976 = vmatpush1.msra.mxu0 0.0
    %1977 = vmatprep.mubr.f32.mxu0 0.0
    %1978 = vmatmul.mubr.f32.gmra.mrb[0].mxu0 %v1911
    %v1979 = vpop.f32.mrb[0].mxu0
    %v1980 = vadd.f32 0.0, %v1979
    %v1981 = vpop.f32.mrb[0].mxu0
    %1982 = vdwg.mxu0
    %v1983 = vsel %vm1782, %v1980, 0.0
    %1984 = vadd.xlane.f32.xlu0 %v1983
    %v1985 = vpop.xlane.xlu0 %1984
    %v1986 = vld [vmem:[#allocation4] sm:$0x1]
    %v1988 = vlaneseq
    %v1989 = vshrl.u32 %v1988, 7
    %v1990 = vsub.s32 0, %v1989
    %v1991 = vrot.slane %v1986, %v1990
    %v1993 = vadd.f32 %v1985, %v1991
    %v1994 = vsub.f32 0.0, %v1993
    %v1995 = vmul.f32 %v1994, 1.442695
    %v1996 = vpow.pop %v1995
    %v1997 = vadd.f32 %v1996, 1.0
    %v1998 = vrcp.pop %v1997
    %v1999 = vmul.f32 1.0, %v1998
    %2001 = vset.pattern.permute.xlu0 0
    %2002 = vperm.xlu0 %2001, %v1999
    %v2003 = vpop.permute.xlu0 %2002
    %2005 = vst [vmem:[#allocation5] sm:$0xff] %v2003
    // Predicated region
    $region58: #{tpu_custom_call.1} parent=1 // pred_check
      _
    $region59: #{tpu_custom_call.1} parent=1 // pred_check_branch
      %2007 = sbr.rel (0) target = $region61
    $region60: #{tpu_custom_call.1} parent=1 // pred_region
      %s2009 = ssub.s32 128, 128
      %2010 = vsyncadd [#allocation6], %s2009
      %s2012 = sshll.u32 [#allocation5], 4
      %s2013 = int_to_ptr.vmem [resolvable:$true] %s2012
      %2015 = dma.vmem_to_hbm [thread:$0]  %s2013, 128, %s14, [#allocation6]
    $region61: #{tpu_custom_call.1} parent=1 // pred_fallthru
      _
    // Predicated region
    $region62: #{tpu_custom_call.1} parent=1 // pred_check
      _
    $region63: #{tpu_custom_call.1} parent=1 // pred_check_branch
      %2017 = sbr.rel (0) target = $region65
    $region64: #{tpu_custom_call.1} parent=1 // pred_region
      %2018 = dma.done [#allocation6], 128
    $region65: #{tpu_custom_call.1} parent=1 // pred_fallthru
      _
    %2019 = vsyncpa [#allocation6], 1

</llo_original>
